<compile_context>
chip_gen: v6e
topology: v6e:2x2x1
jax: 0.10.0
libtpu: 0.0.40
codegen_flags: <defaults>
</compile_context>

<pallas_src>
import functools

import jax
import jax.numpy as jnp
from jax.experimental import pallas as pl
from jax.experimental.pallas import tpu as pltpu

NEURONS = 32
TB = 256          # batch (collocation-point) tile along the lane axis


def _softplus(x):
    # matches torch.nn.functional.softplus (beta=1, threshold=20)
    return jnp.where(x > 20.0, x, jnp.log1p(jnp.exp(jnp.minimum(x, 20.0))))


def mlp_kernel(x_ref, t_ref,
               w1x, w1t, b1,
               w2, b2, w3, b3, w4, b4, w5, b5, w6, b6, w7, b7,
               w8, b8,
               out_ref):
    """Whole 8-layer MLP on one batch tile.  Activations are (32, TB)."""
    xr = x_ref[...]                                             # (1, TB)
    tr = t_ref[...]                                             # (1, TB)

    # Layer 1 (in=2): pure VPU broadcast-FMA — no concat, no MXU pass.
    h = _softplus(w1x[...] * xr + w1t[...] * tr + b1[...])      # (32, TB)

    # Layers 2..7: (32,32) @ (32,TB) on the MXU, bias lane-broadcast.
    for w, b in ((w2, b2), (w3, b3), (w4, b4),
                 (w5, b5), (w6, b6), (w7, b7)):
        h = _softplus(jnp.dot(w[...], h, preferred_element_type=jnp.float32)
                      + b[...])

    # Output layer (out=1): sublane reduction (XLU) instead of a 1-wide
    # matmul; result stays lane-major -> lane-dense store.
    o = jnp.sum(h * w8[...], axis=0, keepdims=True) + b8[...]   # (1, TB)
    out_ref[...] = _softplus(o).astype(out_ref.dtype)


def _const_spec(shape):
    # whole-array block, constant block index -> stays VMEM-resident
    return pl.BlockSpec(shape, lambda i: (0,) * len(shape))


@functools.partial(jax.jit, static_argnames=("tb",))
def net_forward(x, t, params, *, tb=TB):
    """x: (N,1), t: (N,1) float32 -> (N,1) float32.
    params: list of 8 (W, b); W in PyTorch (out, in) layout, b shape (out,)."""
    N = x.shape[0]
    num_tiles = pl.cdiv(N, tb)
    n_pad = num_tiles * tb

    # lane-major rows of points (wrapper glue, not the hot path)
    xr = jnp.zeros((1, n_pad), jnp.float32).at[0, :N].set(x[:, 0])
    tr = jnp.zeros((1, n_pad), jnp.float32).at[0, :N].set(t[:, 0])

    (w1, b1) = params[0]
    hidden = params[1:7]
    (w8, b8) = params[7]

    flat_args = [xr, tr,
                 w1[:, 0:1], w1[:, 1:2], b1.reshape(NEURONS, 1)]
    in_specs = [pl.BlockSpec((1, tb), lambda i: (0, i)),
                pl.BlockSpec((1, tb), lambda i: (0, i)),
                _const_spec((NEURONS, 1)), _const_spec((NEURONS, 1)),
                _const_spec((NEURONS, 1))]
    for w, b in hidden:
        flat_args += [w, b.reshape(NEURONS, 1)]
        in_specs += [_const_spec((NEURONS, NEURONS)), _const_spec((NEURONS, 1))]
    flat_args += [w8.T, b8.reshape(1, 1)]            # (32,1), (1,1)
    in_specs += [_const_spec((NEURONS, 1)), _const_spec((1, 1))]

    out_row = pl.pallas_call(
        mlp_kernel,
        out_shape=jax.ShapeDtypeStruct((1, n_pad), jnp.float32),
        grid=(num_tiles,),
        in_specs=in_specs,
        out_specs=pl.BlockSpec((1, tb), lambda i: (0, i)),
        compiler_params=pltpu.CompilerParams(
            dimension_semantics=("parallel",)),      # megacore on v7x
    )(*flat_args)

    return out_row[0, :N][:, None]


# ------------------------- init (mirrors the torch module) -------------------------

def _xavier_uniform(key, fan_out, fan_in):
    bound = jnp.sqrt(6.0 / (fan_in + fan_out))
    # PyTorch nn.Linear layout: (out_features, in_features)
    return jax.random.uniform(key, (fan_out, fan_in), jnp.float32, -bound, bound)


def _bias_init(key, fan_in, fan_out):
    bound = 1.0 / jnp.sqrt(fan_in)
    return jax.random.uniform(key, (fan_out,), jnp.float32, -bound, bound)


def _spectral_normalize(w, n_iter=30):
    # deterministic power iteration approximating torch spectral_norm's W / sigma
    u = jnp.ones((w.shape[1],), jnp.float32)
    u = u / jnp.linalg.norm(u)
    v = w @ u
    for _ in range(n_iter):
        v = w @ u
        v = v / (jnp.linalg.norm(v) + 1e-12)
        u = w.T @ v
        u = u / (jnp.linalg.norm(u) + 1e-12)
    sigma = v @ (w @ u)
    return w / sigma


def make_params(key):
    dims = [(NEURONS, 2)] + [(NEURONS, NEURONS)] * 6 + [(1, NEURONS)]
    params = []
    for i, (fo, fi) in enumerate(dims):
        key, kw, kb = jax.random.split(key, 3)
        w = _xavier_uniform(kw, fo, fi)
        b = _bias_init(kb, fi, fo)
        if i < 2:   # spectral_norm on hidden_layer1 and hidden_layer2
            w = _spectral_normalize(w)
        params.append((w, b))
    return params


def net_forward_ref(x, t, params):
    """Pure-JAX reference matching the torch forward (softplus on every layer)."""
    h = jnp.concatenate([x, t], axis=1)
    for (w, b) in params:
        h = _softplus(h @ w.T + b)
    return h


if __name__ == "__main__":
    key = jax.random.PRNGKey(0)
    kx, kt, kp = jax.random.split(key, 3)

    N = 1000   # collocation points; not a multiple of TB -> exercises padding + grid
    x = jax.random.uniform(kx, (N, 1), jnp.float32)
    t = jax.random.uniform(kt, (N, 1), jnp.float32)

    params = make_params(kp)

    out = net_forward(x, t, params)
    jax.block_until_ready(out)

    assert out.shape == (N, 1) and out.dtype == jnp.float32
    assert bool(jnp.all(out > 0.0))              # softplus output is positive
    ref = net_forward_ref(x, t, params)
    assert bool(jnp.allclose(out, ref, rtol=1e-2, atol=1e-2))
    print("KERNEL_OK")
</pallas_src>

<mosaic_0001>
module attributes {stable_mosaic.version = 11 : i64} {
  func.func @mlp_kernel(%arg0: i32, %arg1: memref<1x256xf32, #tpu.memory_space<vmem>>, %arg2: memref<1x256xf32, #tpu.memory_space<vmem>>, %arg3: memref<32x1xf32, #tpu.memory_space<vmem>>, %arg4: memref<32x1xf32, #tpu.memory_space<vmem>>, %arg5: memref<32x1xf32, #tpu.memory_space<vmem>>, %arg6: memref<32x32xf32, #tpu.memory_space<vmem>>, %arg7: memref<32x1xf32, #tpu.memory_space<vmem>>, %arg8: memref<32x32xf32, #tpu.memory_space<vmem>>, %arg9: memref<32x1xf32, #tpu.memory_space<vmem>>, %arg10: memref<32x32xf32, #tpu.memory_space<vmem>>, %arg11: memref<32x1xf32, #tpu.memory_space<vmem>>, %arg12: memref<32x32xf32, #tpu.memory_space<vmem>>, %arg13: memref<32x1xf32, #tpu.memory_space<vmem>>, %arg14: memref<32x32xf32, #tpu.memory_space<vmem>>, %arg15: memref<32x1xf32, #tpu.memory_space<vmem>>, %arg16: memref<32x32xf32, #tpu.memory_space<vmem>>, %arg17: memref<32x1xf32, #tpu.memory_space<vmem>>, %arg18: memref<32x1xf32, #tpu.memory_space<vmem>>, %arg19: memref<1x1xf32, #tpu.memory_space<vmem>>, %arg20: memref<1x256xf32, #tpu.memory_space<vmem>>) attributes {dimension_semantics = [#tpu.dimension_semantics<parallel>], iteration_bounds = array<i64: 4>, scalar_prefetch = 0 : i64, scratch_operands = 0 : i64, tpu.core_type = #tpu.core_type<tc>, window_params = [{transform_indices = @transform_0, window_bounds = array<i64: 1, 256>}, {transform_indices = @transform_1, window_bounds = array<i64: 1, 256>}, {pipeline_mode = #tpu.pipeline_mode<synchronous>, transform_indices = @transform_2, window_bounds = array<i64: 32, 1>}, {pipeline_mode = #tpu.pipeline_mode<synchronous>, transform_indices = @transform_3, window_bounds = array<i64: 32, 1>}, {pipeline_mode = #tpu.pipeline_mode<synchronous>, transform_indices = @transform_4, window_bounds = array<i64: 32, 1>}, {pipeline_mode = #tpu.pipeline_mode<synchronous>, transform_indices = @transform_5, window_bounds = array<i64: 32, 32>}, {pipeline_mode = #tpu.pipeline_mode<synchronous>, transform_indices = @transform_6, window_bounds = array<i64: 32, 1>}, {pipeline_mode = #tpu.pipeline_mode<synchronous>, transform_indices = @transform_7, window_bounds = array<i64: 32, 32>}, {pipeline_mode = #tpu.pipeline_mode<synchronous>, transform_indices = @transform_8, window_bounds = array<i64: 32, 1>}, {pipeline_mode = #tpu.pipeline_mode<synchronous>, transform_indices = @transform_9, window_bounds = array<i64: 32, 32>}, {pipeline_mode = #tpu.pipeline_mode<synchronous>, transform_indices = @transform_10, window_bounds = array<i64: 32, 1>}, {pipeline_mode = #tpu.pipeline_mode<synchronous>, transform_indices = @transform_11, window_bounds = array<i64: 32, 32>}, {pipeline_mode = #tpu.pipeline_mode<synchronous>, transform_indices = @transform_12, window_bounds = array<i64: 32, 1>}, {pipeline_mode = #tpu.pipeline_mode<synchronous>, transform_indices = @transform_13, window_bounds = array<i64: 32, 32>}, {pipeline_mode = #tpu.pipeline_mode<synchronous>, transform_indices = @transform_14, window_bounds = array<i64: 32, 1>}, {pipeline_mode = #tpu.pipeline_mode<synchronous>, transform_indices = @transform_15, window_bounds = array<i64: 32, 32>}, {pipeline_mode = #tpu.pipeline_mode<synchronous>, transform_indices = @transform_16, window_bounds = array<i64: 32, 1>}, {pipeline_mode = #tpu.pipeline_mode<synchronous>, transform_indices = @transform_17, window_bounds = array<i64: 32, 1>}, {pipeline_mode = #tpu.pipeline_mode<synchronous>, transform_indices = @transform_18, window_bounds = array<i64: 1, 1>}, {transform_indices = @transform_19, window_bounds = array<i64: 1, 256>}]} {
    %c0 = arith.constant 0 : index
    %c0_0 = arith.constant 0 : index
    %0 = vector.load %arg1[%c0, %c0_0] : memref<1x256xf32, #tpu.memory_space<vmem>>, vector<1x256xf32>
    %c0_1 = arith.constant 0 : index
    %c0_2 = arith.constant 0 : index
    %1 = vector.load %arg2[%c0_1, %c0_2] : memref<1x256xf32, #tpu.memory_space<vmem>>, vector<1x256xf32>
    %c0_3 = arith.constant 0 : index
    %c0_4 = arith.constant 0 : index
    %2 = vector.load %arg3[%c0_3, %c0_4] : memref<32x1xf32, #tpu.memory_space<vmem>>, vector<32x1xf32>
    %3 = vector.broadcast %2 : vector<32x1xf32> to vector<32x256xf32>
    %4 = vector.broadcast %0 : vector<1x256xf32> to vector<32x256xf32>
    %5 = arith.mulf %3, %4 : vector<32x256xf32>
    %c0_5 = arith.constant 0 : index
    %c0_6 = arith.constant 0 : index
    %6 = vector.load %arg4[%c0_5, %c0_6] : memref<32x1xf32, #tpu.memory_space<vmem>>, vector<32x1xf32>
    %7 = vector.broadcast %6 : vector<32x1xf32> to vector<32x256xf32>
    %8 = vector.broadcast %1 : vector<1x256xf32> to vector<32x256xf32>
    %9 = arith.mulf %7, %8 : vector<32x256xf32>
    %10 = arith.addf %5, %9 : vector<32x256xf32>
    %c0_7 = arith.constant 0 : index
    %c0_8 = arith.constant 0 : index
    %11 = vector.load %arg5[%c0_7, %c0_8] : memref<32x1xf32, #tpu.memory_space<vmem>>, vector<32x1xf32>
    %12 = vector.broadcast %11 : vector<32x1xf32> to vector<32x256xf32>
    %13 = arith.addf %10, %12 : vector<32x256xf32>
    %cst = arith.constant 2.000000e+01 : f32
    %14 = vector.broadcast %cst : f32 to vector<32x256xf32>
    %15 = arith.cmpf ogt, %13, %14 : vector<32x256xf32>
    %cst_9 = arith.constant 2.000000e+01 : f32
    %16 = vector.broadcast %cst_9 : f32 to vector<32x256xf32>
    %17 = arith.minimumf %13, %16 : vector<32x256xf32>
    %18 = math.exp %17 : vector<32x256xf32>
    %19 = math.log1p %18 : vector<32x256xf32>
    %20 = arith.select %15, %13, %19 : vector<32x256xi1>, vector<32x256xf32>
    %c0_10 = arith.constant 0 : index
    %c0_11 = arith.constant 0 : index
    %21 = vector.load %arg6[%c0_10, %c0_11] : memref<32x32xf32, #tpu.memory_space<vmem>>, vector<32x32xf32>
    %cst_12 = arith.constant dense<0.000000e+00> : vector<32x256xf32>
    %22 = tpu.matmul %21, %20, %cst_12 {dimension_numbers = #tpu.dot_dimension_numbers<[1], [0], [0], [1], [0, 0, 1, 1], [], []>} : vector<32x32xf32>, vector<32x256xf32>, vector<32x256xf32> -> vector<32x256xf32>
    %c0_13 = arith.constant 0 : index
    %c0_14 = arith.constant 0 : index
    %23 = vector.load %arg7[%c0_13, %c0_14] : memref<32x1xf32, #tpu.memory_space<vmem>>, vector<32x1xf32>
    %24 = vector.broadcast %23 : vector<32x1xf32> to vector<32x256xf32>
    %25 = arith.addf %22, %24 : vector<32x256xf32>
    %cst_15 = arith.constant 2.000000e+01 : f32
    %26 = vector.broadcast %cst_15 : f32 to vector<32x256xf32>
    %27 = arith.cmpf ogt, %25, %26 : vector<32x256xf32>
    %cst_16 = arith.constant 2.000000e+01 : f32
    %28 = vector.broadcast %cst_16 : f32 to vector<32x256xf32>
    %29 = arith.minimumf %25, %28 : vector<32x256xf32>
    %30 = math.exp %29 : vector<32x256xf32>
    %31 = math.log1p %30 : vector<32x256xf32>
    %32 = arith.select %27, %25, %31 : vector<32x256xi1>, vector<32x256xf32>
    %c0_17 = arith.constant 0 : index
    %c0_18 = arith.constant 0 : index
    %33 = vector.load %arg8[%c0_17, %c0_18] : memref<32x32xf32, #tpu.memory_space<vmem>>, vector<32x32xf32>
    %cst_19 = arith.constant dense<0.000000e+00> : vector<32x256xf32>
    %34 = tpu.matmul %33, %32, %cst_19 {dimension_numbers = #tpu.dot_dimension_numbers<[1], [0], [0], [1], [0, 0, 1, 1], [], []>} : vector<32x32xf32>, vector<32x256xf32>, vector<32x256xf32> -> vector<32x256xf32>
    %c0_20 = arith.constant 0 : index
    %c0_21 = arith.constant 0 : index
    %35 = vector.load %arg9[%c0_20, %c0_21] : memref<32x1xf32, #tpu.memory_space<vmem>>, vector<32x1xf32>
    %36 = vector.broadcast %35 : vector<32x1xf32> to vector<32x256xf32>
    %37 = arith.addf %34, %36 : vector<32x256xf32>
    %cst_22 = arith.constant 2.000000e+01 : f32
    %38 = vector.broadcast %cst_22 : f32 to vector<32x256xf32>
    %39 = arith.cmpf ogt, %37, %38 : vector<32x256xf32>
    %cst_23 = arith.constant 2.000000e+01 : f32
    %40 = vector.broadcast %cst_23 : f32 to vector<32x256xf32>
    %41 = arith.minimumf %37, %40 : vector<32x256xf32>
    %42 = math.exp %41 : vector<32x256xf32>
    %43 = math.log1p %42 : vector<32x256xf32>
    %44 = arith.select %39, %37, %43 : vector<32x256xi1>, vector<32x256xf32>
    %c0_24 = arith.constant 0 : index
    %c0_25 = arith.constant 0 : index
    %45 = vector.load %arg10[%c0_24, %c0_25] : memref<32x32xf32, #tpu.memory_space<vmem>>, vector<32x32xf32>
    %cst_26 = arith.constant dense<0.000000e+00> : vector<32x256xf32>
    %46 = tpu.matmul %45, %44, %cst_26 {dimension_numbers = #tpu.dot_dimension_numbers<[1], [0], [0], [1], [0, 0, 1, 1], [], []>} : vector<32x32xf32>, vector<32x256xf32>, vector<32x256xf32> -> vector<32x256xf32>
    %c0_27 = arith.constant 0 : index
    %c0_28 = arith.constant 0 : index
    %47 = vector.load %arg11[%c0_27, %c0_28] : memref<32x1xf32, #tpu.memory_space<vmem>>, vector<32x1xf32>
    %48 = vector.broadcast %47 : vector<32x1xf32> to vector<32x256xf32>
    %49 = arith.addf %46, %48 : vector<32x256xf32>
    %cst_29 = arith.constant 2.000000e+01 : f32
    %50 = vector.broadcast %cst_29 : f32 to vector<32x256xf32>
    %51 = arith.cmpf ogt, %49, %50 : vector<32x256xf32>
    %cst_30 = arith.constant 2.000000e+01 : f32
    %52 = vector.broadcast %cst_30 : f32 to vector<32x256xf32>
    %53 = arith.minimumf %49, %52 : vector<32x256xf32>
    %54 = math.exp %53 : vector<32x256xf32>
    %55 = math.log1p %54 : vector<32x256xf32>
    %56 = arith.select %51, %49, %55 : vector<32x256xi1>, vector<32x256xf32>
    %c0_31 = arith.constant 0 : index
    %c0_32 = arith.constant 0 : index
    %57 = vector.load %arg12[%c0_31, %c0_32] : memref<32x32xf32, #tpu.memory_space<vmem>>, vector<32x32xf32>
    %cst_33 = arith.constant dense<0.000000e+00> : vector<32x256xf32>
    %58 = tpu.matmul %57, %56, %cst_33 {dimension_numbers = #tpu.dot_dimension_numbers<[1], [0], [0], [1], [0, 0, 1, 1], [], []>} : vector<32x32xf32>, vector<32x256xf32>, vector<32x256xf32> -> vector<32x256xf32>
    %c0_34 = arith.constant 0 : index
    %c0_35 = arith.constant 0 : index
    %59 = vector.load %arg13[%c0_34, %c0_35] : memref<32x1xf32, #tpu.memory_space<vmem>>, vector<32x1xf32>
    %60 = vector.broadcast %59 : vector<32x1xf32> to vector<32x256xf32>
    %61 = arith.addf %58, %60 : vector<32x256xf32>
    %cst_36 = arith.constant 2.000000e+01 : f32
    %62 = vector.broadcast %cst_36 : f32 to vector<32x256xf32>
    %63 = arith.cmpf ogt, %61, %62 : vector<32x256xf32>
    %cst_37 = arith.constant 2.000000e+01 : f32
    %64 = vector.broadcast %cst_37 : f32 to vector<32x256xf32>
    %65 = arith.minimumf %61, %64 : vector<32x256xf32>
    %66 = math.exp %65 : vector<32x256xf32>
    %67 = math.log1p %66 : vector<32x256xf32>
    %68 = arith.select %63, %61, %67 : vector<32x256xi1>, vector<32x256xf32>
    %c0_38 = arith.constant 0 : index
    %c0_39 = arith.constant 0 : index
    %69 = vector.load %arg14[%c0_38, %c0_39] : memref<32x32xf32, #tpu.memory_space<vmem>>, vector<32x32xf32>
    %cst_40 = arith.constant dense<0.000000e+00> : vector<32x256xf32>
    %70 = tpu.matmul %69, %68, %cst_40 {dimension_numbers = #tpu.dot_dimension_numbers<[1], [0], [0], [1], [0, 0, 1, 1], [], []>} : vector<32x32xf32>, vector<32x256xf32>, vector<32x256xf32> -> vector<32x256xf32>
    %c0_41 = arith.constant 0 : index
    %c0_42 = arith.constant 0 : index
    %71 = vector.load %arg15[%c0_41, %c0_42] : memref<32x1xf32, #tpu.memory_space<vmem>>, vector<32x1xf32>
    %72 = vector.broadcast %71 : vector<32x1xf32> to vector<32x256xf32>
    %73 = arith.addf %70, %72 : vector<32x256xf32>
    %cst_43 = arith.constant 2.000000e+01 : f32
    %74 = vector.broadcast %cst_43 : f32 to vector<32x256xf32>
    %75 = arith.cmpf ogt, %73, %74 : vector<32x256xf32>
    %cst_44 = arith.constant 2.000000e+01 : f32
    %76 = vector.broadcast %cst_44 : f32 to vector<32x256xf32>
    %77 = arith.minimumf %73, %76 : vector<32x256xf32>
    %78 = math.exp %77 : vector<32x256xf32>
    %79 = math.log1p %78 : vector<32x256xf32>
    %80 = arith.select %75, %73, %79 : vector<32x256xi1>, vector<32x256xf32>
    %c0_45 = arith.constant 0 : index
    %c0_46 = arith.constant 0 : index
    %81 = vector.load %arg16[%c0_45, %c0_46] : memref<32x32xf32, #tpu.memory_space<vmem>>, vector<32x32xf32>
    %cst_47 = arith.constant dense<0.000000e+00> : vector<32x256xf32>
    %82 = tpu.matmul %81, %80, %cst_47 {dimension_numbers = #tpu.dot_dimension_numbers<[1], [0], [0], [1], [0, 0, 1, 1], [], []>} : vector<32x32xf32>, vector<32x256xf32>, vector<32x256xf32> -> vector<32x256xf32>
    %c0_48 = arith.constant 0 : index
    %c0_49 = arith.constant 0 : index
    %83 = vector.load %arg17[%c0_48, %c0_49] : memref<32x1xf32, #tpu.memory_space<vmem>>, vector<32x1xf32>
    %84 = vector.broadcast %83 : vector<32x1xf32> to vector<32x256xf32>
    %85 = arith.addf %82, %84 : vector<32x256xf32>
    %cst_50 = arith.constant 2.000000e+01 : f32
    %86 = vector.broadcast %cst_50 : f32 to vector<32x256xf32>
    %87 = arith.cmpf ogt, %85, %86 : vector<32x256xf32>
    %cst_51 = arith.constant 2.000000e+01 : f32
    %88 = vector.broadcast %cst_51 : f32 to vector<32x256xf32>
    %89 = arith.minimumf %85, %88 : vector<32x256xf32>
    %90 = math.exp %89 : vector<32x256xf32>
    %91 = math.log1p %90 : vector<32x256xf32>
    %92 = arith.select %87, %85, %91 : vector<32x256xi1>, vector<32x256xf32>
    %c0_52 = arith.constant 0 : index
    %c0_53 = arith.constant 0 : index
    %93 = vector.load %arg18[%c0_52, %c0_53] : memref<32x1xf32, #tpu.memory_space<vmem>>, vector<32x1xf32>
    %94 = vector.broadcast %93 : vector<32x1xf32> to vector<32x256xf32>
    %95 = arith.mulf %92, %94 : vector<32x256xf32>
    %cst_54 = arith.constant dense<0.000000e+00> : vector<256xf32>
    %96 = vector.multi_reduction <add>, %95, %cst_54 [0] : vector<32x256xf32> to vector<256xf32>
    %97 = vector.shape_cast %96 : vector<256xf32> to vector<1x256xf32>
    %c0_55 = arith.constant 0 : index
    %c0_56 = arith.constant 0 : index
    %98 = vector.load %arg19[%c0_55, %c0_56] : memref<1x1xf32, #tpu.memory_space<vmem>>, vector<1x1xf32>
    %99 = vector.broadcast %98 : vector<1x1xf32> to vector<1x256xf32>
    %100 = arith.addf %97, %99 : vector<1x256xf32>
    %cst_57 = arith.constant 2.000000e+01 : f32
    %101 = vector.broadcast %cst_57 : f32 to vector<1x256xf32>
    %102 = arith.cmpf ogt, %100, %101 : vector<1x256xf32>
    %cst_58 = arith.constant 2.000000e+01 : f32
    %103 = vector.broadcast %cst_58 : f32 to vector<1x256xf32>
    %104 = arith.minimumf %100, %103 : vector<1x256xf32>
    %105 = math.exp %104 : vector<1x256xf32>
    %106 = math.log1p %105 : vector<1x256xf32>
    %107 = arith.select %102, %100, %106 : vector<1x256xi1>, vector<1x256xf32>
    %c0_59 = arith.constant 0 : index
    %c0_60 = arith.constant 0 : index
    %108 = vector.load %arg20[%c0_59, %c0_60] : memref<1x256xf32, #tpu.memory_space<vmem>>, vector<1x256xf32>
    tpu.vector_store %arg20[%c0_59, %c0_60], %107 {strides = array<i32>} : memref<1x256xf32, #tpu.memory_space<vmem>>, vector<1x256xf32>,
    return
  }
  func.func @transform_0(%arg0: i32) -> (i32, i32) {
    %c0_i32 = arith.constant 0 : i32
    %c0_i32_0 = arith.constant 0 : i32
    return %c0_i32, %arg0 : i32, i32
  }
  func.func @transform_1(%arg0: i32) -> (i32, i32) {
    %c0_i32 = arith.constant 0 : i32
    %c0_i32_0 = arith.constant 0 : i32
    return %c0_i32, %arg0 : i32, i32
  }
  func.func @transform_2(%arg0: i32) -> (i32, i32) {
    %c0_i32 = arith.constant 0 : i32
    %c0_i32_0 = arith.constant 0 : i32
    %c0_i32_1 = arith.constant 0 : i32
    return %c0_i32, %c0_i32_0 : i32, i32
  }
  func.func @transform_3(%arg0: i32) -> (i32, i32) {
    %c0_i32 = arith.constant 0 : i32
    %c0_i32_0 = arith.constant 0 : i32
    %c0_i32_1 = arith.constant 0 : i32
    return %c0_i32, %c0_i32_0 : i32, i32
  }
  func.func @transform_4(%arg0: i32) -> (i32, i32) {
    %c0_i32 = arith.constant 0 : i32
    %c0_i32_0 = arith.constant 0 : i32
    %c0_i32_1 = arith.constant 0 : i32
    return %c0_i32, %c0_i32_0 : i32, i32
  }
  func.func @transform_5(%arg0: i32) -> (i32, i32) {
    %c0_i32 = arith.constant 0 : i32
    %c0_i32_0 = arith.constant 0 : i32
    %c0_i32_1 = arith.constant 0 : i32
    return %c0_i32, %c0_i32_0 : i32, i32
  }
  func.func @transform_6(%arg0: i32) -> (i32, i32) {
    %c0_i32 = arith.constant 0 : i32
    %c0_i32_0 = arith.constant 0 : i32
    %c0_i32_1 = arith.constant 0 : i32
    return %c0_i32, %c0_i32_0 : i32, i32
  }
  func.func @transform_7(%arg0: i32) -> (i32, i32) {
    %c0_i32 = arith.constant 0 : i32
    %c0_i32_0 = arith.constant 0 : i32
    %c0_i32_1 = arith.constant 0 : i32
    return %c0_i32, %c0_i32_0 : i32, i32
  }
  func.func @transform_8(%arg0: i32) -> (i32, i32) {
    %c0_i32 = arith.constant 0 : i32
    %c0_i32_0 = arith.constant 0 : i32
    %c0_i32_1 = arith.constant 0 : i32
    return %c0_i32, %c0_i32_0 : i32, i32
  }
  func.func @transform_9(%arg0: i32) -> (i32, i32) {
    %c0_i32 = arith.constant 0 : i32
    %c0_i32_0 = arith.constant 0 : i32
    %c0_i32_1 = arith.constant 0 : i32
    return %c0_i32, %c0_i32_0 : i32, i32
  }
  func.func @transform_10(%arg0: i32) -> (i32, i32) {
    %c0_i32 = arith.constant 0 : i32
    %c0_i32_0 = arith.constant 0 : i32
    %c0_i32_1 = arith.constant 0 : i32
    return %c0_i32, %c0_i32_0 : i32, i32
  }
  func.func @transform_11(%arg0: i32) -> (i32, i32) {
    %c0_i32 = arith.constant 0 : i32
    %c0_i32_0 = arith.constant 0 : i32
    %c0_i32_1 = arith.constant 0 : i32
    return %c0_i32, %c0_i32_0 : i32, i32
  }
  func.func @transform_12(%arg0: i32) -> (i32, i32) {
    %c0_i32 = arith.constant 0 : i32
    %c0_i32_0 = arith.constant 0 : i32
    %c0_i32_1 = arith.constant 0 : i32
    return %c0_i32, %c0_i32_0 : i32, i32
  }
  func.func @transform_13(%arg0: i32) -> (i32, i32) {
    %c0_i32 = arith.constant 0 : i32
    %c0_i32_0 = arith.constant 0 : i32
    %c0_i32_1 = arith.constant 0 : i32
    return %c0_i32, %c0_i32_0 : i32, i32
  }
  func.func @transform_14(%arg0: i32) -> (i32, i32) {
    %c0_i32 = arith.constant 0 : i32
    %c0_i32_0 = arith.constant 0 : i32
    %c0_i32_1 = arith.constant 0 : i32
    return %c0_i32, %c0_i32_0 : i32, i32
  }
  func.func @transform_15(%arg0: i32) -> (i32, i32) {
    %c0_i32 = arith.constant 0 : i32
    %c0_i32_0 = arith.constant 0 : i32
    %c0_i32_1 = arith.constant 0 : i32
    return %c0_i32, %c0_i32_0 : i32, i32
  }
  func.func @transform_16(%arg0: i32) -> (i32, i32) {
    %c0_i32 = arith.constant 0 : i32
    %c0_i32_0 = arith.constant 0 : i32
    %c0_i32_1 = arith.constant 0 : i32
    return %c0_i32, %c0_i32_0 : i32, i32
  }
  func.func @transform_17(%arg0: i32) -> (i32, i32) {
    %c0_i32 = arith.constant 0 : i32
    %c0_i32_0 = arith.constant 0 : i32
    %c0_i32_1 = arith.constant 0 : i32
    return %c0_i32, %c0_i32_0 : i32, i32
  }
  func.func @transform_18(%arg0: i32) -> (i32, i32) {
    %c0_i32 = arith.constant 0 : i32
    %c0_i32_0 = arith.constant 0 : i32
    %c0_i32_1 = arith.constant 0 : i32
    return %c0_i32, %c0_i32_0 : i32, i32
  }
  func.func @transform_19(%arg0: i32) -> (i32, i32) {
    %c0_i32 = arith.constant 0 : i32
    %c0_i32_0 = arith.constant 0 : i32
    return %c0_i32, %arg0 : i32, i32
  }
}

</mosaic_0001>

<llo_original>
// kernel: net_forward.1
$region0: #{net_forward.1}
  #allocation0 [shape = 'u32[]', space=smem, size = 0x4, offset = 0x4, fixed_abs, tag = 'smem constant byte address 0x4 - core index']
  #allocation1 [shape = 'u32[144,128]{1,0:T(1,128)}', space=vmem, size = 0x12000, scoped, tag = 'internal scratch']
  #allocation2 [shape = 'f32[1,1]{1,0:T(1,128)S(1)}', space=vmem, size = 0x200, scoped, tag = 'scoped memory for net_forward.1']
  %s0 = inlined_call_operand.vmem [shape: f32[1,1024], index: 0, kind: input, shape index: {}]
  %s1 = inlined_call_operand.vmem [shape: f32[1,1024], index: 1, kind: input, shape index: {}]
  %s2 = inlined_call_operand.vmem [shape: f32[32,1], index: 2, kind: input, shape index: {}]
  %s3 = inlined_call_operand.vmem [shape: f32[32,1], index: 3, kind: input, shape index: {}]
  %s4 = inlined_call_operand.vmem [shape: f32[32,1], index: 4, kind: input, shape index: {}]
  %s5 = inlined_call_operand.vmem [shape: f32[32,32], index: 5, kind: input, shape index: {}]
  %s6 = inlined_call_operand.vmem [shape: f32[32,1], index: 6, kind: input, shape index: {}]
  %s7 = inlined_call_operand.vmem [shape: f32[32,32], index: 7, kind: input, shape index: {}]
  %s8 = inlined_call_operand.vmem [shape: f32[32,1], index: 8, kind: input, shape index: {}]
  %s9 = inlined_call_operand.vmem [shape: f32[32,32], index: 9, kind: input, shape index: {}]
  %s10 = inlined_call_operand.vmem [shape: f32[32,1], index: 10, kind: input, shape index: {}]
  %s11 = inlined_call_operand.vmem [shape: f32[32,32], index: 11, kind: input, shape index: {}]
  %s12 = inlined_call_operand.vmem [shape: f32[32,1], index: 12, kind: input, shape index: {}]
  %s13 = inlined_call_operand.vmem [shape: f32[32,32], index: 13, kind: input, shape index: {}]
  %s14 = inlined_call_operand.vmem [shape: f32[32,1], index: 14, kind: input, shape index: {}]
  %s15 = inlined_call_operand.vmem [shape: f32[32,32], index: 15, kind: input, shape index: {}]
  %s16 = inlined_call_operand.vmem [shape: f32[32,1], index: 16, kind: input, shape index: {}]
  %s17 = inlined_call_operand.vmem [shape: f32[32,1], index: 17, kind: input, shape index: {}]
  %s18 = inlined_call_operand.<no memory space> [shape: f32[1,1], index: 18, kind: input, shape index: {}]
  %s19 = inlined_call_operand.vmem [shape: f32[1,1024], index: 19, kind: output, shape index: {}]
  %s20 = sld [smem:[#allocation0]]
  $region109: #{net_forward.1} parent=0
    _
  %s22 = ssub.s32 1, %s20
  %s23 = scalar_select 0, %s22, %s20
  %v24 = vstv %s18
  %25 = vst [vmem:[#allocation2] sm:$0x1] %v24
  loop: start=0, step=1, limit=6
  $region2: #{net_forward.1} parent=0 // loop_pre_header
    _
  $region3: #{net_forward.1} parent=0 // loop_header
    %s27 = sphi 0, %s31
    %p28 = scmp.ge.s32.totalorder %s27, 6
    %s37 = sphi 0, %s39
    %s40 = sphi 0, %s37
    %s41 = sphi 0, %s40
    %s57 = sphi 0, %s41
    %s63 = sphi 0, %s65
    %s66 = sphi 0, %s63
    %s67 = sphi 0, %s66
    %s83 = sphi 0, %s67
    %s87 = sphi 0, %s87
    %s89 = sphi 0, %s87
    %s90 = sphi 0, %s89
    %s104 = sphi 0, %s90
    %s108 = sphi 0, %s108
    %s110 = sphi 0, %s108
    %s111 = sphi 0, %s110
    %s125 = sphi 0, %s111
    %s129 = sphi 0, %s129
    %s131 = sphi 0, %s129
    %s132 = sphi 0, %s131
    %s146 = sphi 0, %s132
    %s150 = sphi 0, %s150
    %s152 = sphi 0, %s150
    %s153 = sphi 0, %s152
    %s167 = sphi 0, %s153
    %s171 = sphi 0, %s171
    %s173 = sphi 0, %s171
    %s174 = sphi 0, %s173
    %s188 = sphi 0, %s174
    %s192 = sphi 0, %s192
    %s194 = sphi 0, %s192
    %s195 = sphi 0, %s194
    %s209 = sphi 0, %s195
    %s213 = sphi 0, %s213
    %s215 = sphi 0, %s213
    %s216 = sphi 0, %s215
    %s230 = sphi 0, %s216
    %s234 = sphi 0, %s234
    %s236 = sphi 0, %s234
    %s237 = sphi 0, %s236
    %s251 = sphi 0, %s237
    %s255 = sphi 0, %s255
    %s257 = sphi 0, %s255
    %s258 = sphi 0, %s257
    %s272 = sphi 0, %s258
    %s276 = sphi 0, %s276
    %s278 = sphi 0, %s276
    %s279 = sphi 0, %s278
    %s293 = sphi 0, %s279
    %s297 = sphi 0, %s297
    %s299 = sphi 0, %s297
    %s300 = sphi 0, %s299
    %s314 = sphi 0, %s300
    %s318 = sphi 0, %s318
    %s320 = sphi 0, %s318
    %s321 = sphi 0, %s320
    %s335 = sphi 0, %s321
    %s339 = sphi 0, %s339
    %s341 = sphi 0, %s339
    %s342 = sphi 0, %s341
    %s356 = sphi 0, %s342
    %s360 = sphi 0, %s360
    %s362 = sphi 0, %s360
    %s363 = sphi 0, %s362
    %s377 = sphi 0, %s363
    %s381 = sphi 0, %s381
    %s383 = sphi 0, %s381
    %s384 = sphi 0, %s383
    %s398 = sphi 0, %s384
    %s402 = sphi 0, %s402
    %s404 = sphi 0, %s402
    %s405 = sphi 0, %s404
    %s419 = sphi 0, %s405
    %s423 = sphi 0, %s423
    %s425 = sphi 0, %s423
    %s426 = sphi 0, %s425
    %s440 = sphi 0, %s426
    %s446 = sphi 0, %s448
    %s449 = sphi 0, %s446
    %s450 = sphi 0, %s449
    %s466 = sphi 0, %s450
  $region4: #{net_forward.1} parent=0 // loop_header_branch
    %30 = sbr.rel (%p28) target = $region8
  $region5: #{net_forward.1} parent=0 // loop_body
    %s32 = ssub.s32 %s27, 1
    %s33 = ssub.s32 %s27, 2
    %s34 = sadd.s32 %s27, 1
    %s35 = ssub.s32 %s27, %s34
    %p36 = scmp.eq.s32.totalorder %s35, 0
    %s38 = sadd.s32 %s37, 1
    %s39 = scalar_select %p36, %s37, %s38
    %p42 = pneg %p36
    %p43 = scmp.eq.s32.totalorder %s27, 3
    %p44 = por %p42, %p43
    %p45 = scmp.ne.s32.totalorder %s37, %s40
    %p46 = scmp.eq.s32.totalorder %s27, 0
    %p47 = por %p45, %p46
    %p48 = scmp.ne.s32.totalorder %s37, %s40
    %p49 = scmp.eq.s32.totalorder %s32, 3
    %p50 = por %p48, %p49
    %p51 = scmp.ne.s32.totalorder %s40, %s41
    %p52 = scmp.eq.s32.totalorder %s32, 0
    %p53 = por %p51, %p52
    %p54 = scmp.ne.s32.totalorder %s40, %s41
    %p55 = scmp.eq.s32.totalorder %s33, 3
    %p56 = por %p54, %p55
    %p58 = scmp.ne.s32.totalorder %s41, %s57
    %p59 = scmp.eq.s32.totalorder %s33, 0
    %p60 = por %p58, %p59
    %s61 = ssub.s32 %s27, %s34
    %p62 = scmp.eq.s32.totalorder %s61, 0
    %s64 = sadd.s32 %s63, 1
    %s65 = scalar_select %p62, %s63, %s64
    %p68 = pneg %p62
    %p69 = scmp.eq.s32.totalorder %s27, 3
    %p70 = por %p68, %p69
    %p71 = scmp.ne.s32.totalorder %s63, %s66
    %p72 = scmp.eq.s32.totalorder %s27, 0
    %p73 = por %p71, %p72
    %p74 = scmp.ne.s32.totalorder %s63, %s66
    %p75 = scmp.eq.s32.totalorder %s32, 3
    %p76 = por %p74, %p75
    %p77 = scmp.ne.s32.totalorder %s66, %s67
    %p78 = scmp.eq.s32.totalorder %s32, 0
    %p79 = por %p77, %p78
    %p80 = scmp.ne.s32.totalorder %s66, %s67
    %p81 = scmp.eq.s32.totalorder %s33, 3
    %p82 = por %p80, %p81
    %p84 = scmp.ne.s32.totalorder %s67, %s83
    %p85 = scmp.eq.s32.totalorder %s33, 0
    %p86 = por %p84, %p85
    %s88 = sadd.s32 %s87, 1
    %p91 = scmp.eq.s32.totalorder %s27, 3
    %p92 = scmp.ne.s32.totalorder %s87, %s89
    %p93 = scmp.eq.s32.totalorder %s27, 0
    %p94 = por %p92, %p93
    %p95 = scmp.ne.s32.totalorder %s87, %s89
    %p96 = scmp.eq.s32.totalorder %s32, 3
    %p97 = por %p95, %p96
    %p98 = scmp.ne.s32.totalorder %s89, %s90
    %p99 = scmp.eq.s32.totalorder %s32, 0
    %p100 = por %p98, %p99
    %p101 = scmp.ne.s32.totalorder %s89, %s90
    %p102 = scmp.eq.s32.totalorder %s33, 3
    %p103 = por %p101, %p102
    %p105 = scmp.ne.s32.totalorder %s90, %s104
    %p106 = scmp.eq.s32.totalorder %s33, 0
    %p107 = por %p105, %p106
    %s109 = sadd.s32 %s108, 1
    %p112 = scmp.eq.s32.totalorder %s27, 3
    %p113 = scmp.ne.s32.totalorder %s108, %s110
    %p114 = scmp.eq.s32.totalorder %s27, 0
    %p115 = por %p113, %p114
    %p116 = scmp.ne.s32.totalorder %s108, %s110
    %p117 = scmp.eq.s32.totalorder %s32, 3
    %p118 = por %p116, %p117
    %p119 = scmp.ne.s32.totalorder %s110, %s111
    %p120 = scmp.eq.s32.totalorder %s32, 0
    %p121 = por %p119, %p120
    %p122 = scmp.ne.s32.totalorder %s110, %s111
    %p123 = scmp.eq.s32.totalorder %s33, 3
    %p124 = por %p122, %p123
    %p126 = scmp.ne.s32.totalorder %s111, %s125
    %p127 = scmp.eq.s32.totalorder %s33, 0
    %p128 = por %p126, %p127
    %s130 = sadd.s32 %s129, 1
    %p133 = scmp.eq.s32.totalorder %s27, 3
    %p134 = scmp.ne.s32.totalorder %s129, %s131
    %p135 = scmp.eq.s32.totalorder %s27, 0
    %p136 = por %p134, %p135
    %p137 = scmp.ne.s32.totalorder %s129, %s131
    %p138 = scmp.eq.s32.totalorder %s32, 3
    %p139 = por %p137, %p138
    %p140 = scmp.ne.s32.totalorder %s131, %s132
    %p141 = scmp.eq.s32.totalorder %s32, 0
    %p142 = por %p140, %p141
    %p143 = scmp.ne.s32.totalorder %s131, %s132
    %p144 = scmp.eq.s32.totalorder %s33, 3
    %p145 = por %p143, %p144
    %p147 = scmp.ne.s32.totalorder %s132, %s146
    %p148 = scmp.eq.s32.totalorder %s33, 0
    %p149 = por %p147, %p148
    %s151 = sadd.s32 %s150, 1
    %p154 = scmp.eq.s32.totalorder %s27, 3
    %p155 = scmp.ne.s32.totalorder %s150, %s152
    %p156 = scmp.eq.s32.totalorder %s27, 0
    %p157 = por %p155, %p156
    %p158 = scmp.ne.s32.totalorder %s150, %s152
    %p159 = scmp.eq.s32.totalorder %s32, 3
    %p160 = por %p158, %p159
    %p161 = scmp.ne.s32.totalorder %s152, %s153
    %p162 = scmp.eq.s32.totalorder %s32, 0
    %p163 = por %p161, %p162
    %p164 = scmp.ne.s32.totalorder %s152, %s153
    %p165 = scmp.eq.s32.totalorder %s33, 3
    %p166 = por %p164, %p165
    %p168 = scmp.ne.s32.totalorder %s153, %s167
    %p169 = scmp.eq.s32.totalorder %s33, 0
    %p170 = por %p168, %p169
    %s172 = sadd.s32 %s171, 1
    %p175 = scmp.eq.s32.totalorder %s27, 3
    %p176 = scmp.ne.s32.totalorder %s171, %s173
    %p177 = scmp.eq.s32.totalorder %s27, 0
    %p178 = por %p176, %p177
    %p179 = scmp.ne.s32.totalorder %s171, %s173
    %p180 = scmp.eq.s32.totalorder %s32, 3
    %p181 = por %p179, %p180
    %p182 = scmp.ne.s32.totalorder %s173, %s174
    %p183 = scmp.eq.s32.totalorder %s32, 0
    %p184 = por %p182, %p183
    %p185 = scmp.ne.s32.totalorder %s173, %s174
    %p186 = scmp.eq.s32.totalorder %s33, 3
    %p187 = por %p185, %p186
    %p189 = scmp.ne.s32.totalorder %s174, %s188
    %p190 = scmp.eq.s32.totalorder %s33, 0
    %p191 = por %p189, %p190
    %s193 = sadd.s32 %s192, 1
    %p196 = scmp.eq.s32.totalorder %s27, 3
    %p197 = scmp.ne.s32.totalorder %s192, %s194
    %p198 = scmp.eq.s32.totalorder %s27, 0
    %p199 = por %p197, %p198
    %p200 = scmp.ne.s32.totalorder %s192, %s194
    %p201 = scmp.eq.s32.totalorder %s32, 3
    %p202 = por %p200, %p201
    %p203 = scmp.ne.s32.totalorder %s194, %s195
    %p204 = scmp.eq.s32.totalorder %s32, 0
    %p205 = por %p203, %p204
    %p206 = scmp.ne.s32.totalorder %s194, %s195
    %p207 = scmp.eq.s32.totalorder %s33, 3
    %p208 = por %p206, %p207
    %p210 = scmp.ne.s32.totalorder %s195, %s209
    %p211 = scmp.eq.s32.totalorder %s33, 0
    %p212 = por %p210, %p211
    %s214 = sadd.s32 %s213, 1
    %p217 = scmp.eq.s32.totalorder %s27, 3
    %p218 = scmp.ne.s32.totalorder %s213, %s215
    %p219 = scmp.eq.s32.totalorder %s27, 0
    %p220 = por %p218, %p219
    %p221 = scmp.ne.s32.totalorder %s213, %s215
    %p222 = scmp.eq.s32.totalorder %s32, 3
    %p223 = por %p221, %p222
    %p224 = scmp.ne.s32.totalorder %s215, %s216
    %p225 = scmp.eq.s32.totalorder %s32, 0
    %p226 = por %p224, %p225
    %p227 = scmp.ne.s32.totalorder %s215, %s216
    %p228 = scmp.eq.s32.totalorder %s33, 3
    %p229 = por %p227, %p228
    %p231 = scmp.ne.s32.totalorder %s216, %s230
    %p232 = scmp.eq.s32.totalorder %s33, 0
    %p233 = por %p231, %p232
    %s235 = sadd.s32 %s234, 1
    %p238 = scmp.eq.s32.totalorder %s27, 3
    %p239 = scmp.ne.s32.totalorder %s234, %s236
    %p240 = scmp.eq.s32.totalorder %s27, 0
    %p241 = por %p239, %p240
    %p242 = scmp.ne.s32.totalorder %s234, %s236
    %p243 = scmp.eq.s32.totalorder %s32, 3
    %p244 = por %p242, %p243
    %p245 = scmp.ne.s32.totalorder %s236, %s237
    %p246 = scmp.eq.s32.totalorder %s32, 0
    %p247 = por %p245, %p246
    %p248 = scmp.ne.s32.totalorder %s236, %s237
    %p249 = scmp.eq.s32.totalorder %s33, 3
    %p250 = por %p248, %p249
    %p252 = scmp.ne.s32.totalorder %s237, %s251
    %p253 = scmp.eq.s32.totalorder %s33, 0
    %p254 = por %p252, %p253
    %s256 = sadd.s32 %s255, 1
    %p259 = scmp.eq.s32.totalorder %s27, 3
    %p260 = scmp.ne.s32.totalorder %s255, %s257
    %p261 = scmp.eq.s32.totalorder %s27, 0
    %p262 = por %p260, %p261
    %p263 = scmp.ne.s32.totalorder %s255, %s257
    %p264 = scmp.eq.s32.totalorder %s32, 3
    %p265 = por %p263, %p264
    %p266 = scmp.ne.s32.totalorder %s257, %s258
    %p267 = scmp.eq.s32.totalorder %s32, 0
    %p268 = por %p266, %p267
    %p269 = scmp.ne.s32.totalorder %s257, %s258
    %p270 = scmp.eq.s32.totalorder %s33, 3
    %p271 = por %p269, %p270
    %p273 = scmp.ne.s32.totalorder %s258, %s272
    %p274 = scmp.eq.s32.totalorder %s33, 0
    %p275 = por %p273, %p274
    %s277 = sadd.s32 %s276, 1
    %p280 = scmp.eq.s32.totalorder %s27, 3
    %p281 = scmp.ne.s32.totalorder %s276, %s278
    %p282 = scmp.eq.s32.totalorder %s27, 0
    %p283 = por %p281, %p282
    %p284 = scmp.ne.s32.totalorder %s276, %s278
    %p285 = scmp.eq.s32.totalorder %s32, 3
    %p286 = por %p284, %p285
    %p287 = scmp.ne.s32.totalorder %s278, %s279
    %p288 = scmp.eq.s32.totalorder %s32, 0
    %p289 = por %p287, %p288
    %p290 = scmp.ne.s32.totalorder %s278, %s279
    %p291 = scmp.eq.s32.totalorder %s33, 3
    %p292 = por %p290, %p291
    %p294 = scmp.ne.s32.totalorder %s279, %s293
    %p295 = scmp.eq.s32.totalorder %s33, 0
    %p296 = por %p294, %p295
    %s298 = sadd.s32 %s297, 1
    %p301 = scmp.eq.s32.totalorder %s27, 3
    %p302 = scmp.ne.s32.totalorder %s297, %s299
    %p303 = scmp.eq.s32.totalorder %s27, 0
    %p304 = por %p302, %p303
    %p305 = scmp.ne.s32.totalorder %s297, %s299
    %p306 = scmp.eq.s32.totalorder %s32, 3
    %p307 = por %p305, %p306
    %p308 = scmp.ne.s32.totalorder %s299, %s300
    %p309 = scmp.eq.s32.totalorder %s32, 0
    %p310 = por %p308, %p309
    %p311 = scmp.ne.s32.totalorder %s299, %s300
    %p312 = scmp.eq.s32.totalorder %s33, 3
    %p313 = por %p311, %p312
    %p315 = scmp.ne.s32.totalorder %s300, %s314
    %p316 = scmp.eq.s32.totalorder %s33, 0
    %p317 = por %p315, %p316
    %s319 = sadd.s32 %s318, 1
    %p322 = scmp.eq.s32.totalorder %s27, 3
    %p323 = scmp.ne.s32.totalorder %s318, %s320
    %p324 = scmp.eq.s32.totalorder %s27, 0
    %p325 = por %p323, %p324
    %p326 = scmp.ne.s32.totalorder %s318, %s320
    %p327 = scmp.eq.s32.totalorder %s32, 3
    %p328 = por %p326, %p327
    %p329 = scmp.ne.s32.totalorder %s320, %s321
    %p330 = scmp.eq.s32.totalorder %s32, 0
    %p331 = por %p329, %p330
    %p332 = scmp.ne.s32.totalorder %s320, %s321
    %p333 = scmp.eq.s32.totalorder %s33, 3
    %p334 = por %p332, %p333
    %p336 = scmp.ne.s32.totalorder %s321, %s335
    %p337 = scmp.eq.s32.totalorder %s33, 0
    %p338 = por %p336, %p337
    %s340 = sadd.s32 %s339, 1
    %p343 = scmp.eq.s32.totalorder %s27, 3
    %p344 = scmp.ne.s32.totalorder %s339, %s341
    %p345 = scmp.eq.s32.totalorder %s27, 0
    %p346 = por %p344, %p345
    %p347 = scmp.ne.s32.totalorder %s339, %s341
    %p348 = scmp.eq.s32.totalorder %s32, 3
    %p349 = por %p347, %p348
    %p350 = scmp.ne.s32.totalorder %s341, %s342
    %p351 = scmp.eq.s32.totalorder %s32, 0
    %p352 = por %p350, %p351
    %p353 = scmp.ne.s32.totalorder %s341, %s342
    %p354 = scmp.eq.s32.totalorder %s33, 3
    %p355 = por %p353, %p354
    %p357 = scmp.ne.s32.totalorder %s342, %s356
    %p358 = scmp.eq.s32.totalorder %s33, 0
    %p359 = por %p357, %p358
    %s361 = sadd.s32 %s360, 1
    %p364 = scmp.eq.s32.totalorder %s27, 3
    %p365 = scmp.ne.s32.totalorder %s360, %s362
    %p366 = scmp.eq.s32.totalorder %s27, 0
    %p367 = por %p365, %p366
    %p368 = scmp.ne.s32.totalorder %s360, %s362
    %p369 = scmp.eq.s32.totalorder %s32, 3
    %p370 = por %p368, %p369
    %p371 = scmp.ne.s32.totalorder %s362, %s363
    %p372 = scmp.eq.s32.totalorder %s32, 0
    %p373 = por %p371, %p372
    %p374 = scmp.ne.s32.totalorder %s362, %s363
    %p375 = scmp.eq.s32.totalorder %s33, 3
    %p376 = por %p374, %p375
    %p378 = scmp.ne.s32.totalorder %s363, %s377
    %p379 = scmp.eq.s32.totalorder %s33, 0
    %p380 = por %p378, %p379
    %s382 = sadd.s32 %s381, 1
    %p385 = scmp.eq.s32.totalorder %s27, 3
    %p386 = scmp.ne.s32.totalorder %s381, %s383
    %p387 = scmp.eq.s32.totalorder %s27, 0
    %p388 = por %p386, %p387
    %p389 = scmp.ne.s32.totalorder %s381, %s383
    %p390 = scmp.eq.s32.totalorder %s32, 3
    %p391 = por %p389, %p390
    %p392 = scmp.ne.s32.totalorder %s383, %s384
    %p393 = scmp.eq.s32.totalorder %s32, 0
    %p394 = por %p392, %p393
    %p395 = scmp.ne.s32.totalorder %s383, %s384
    %p396 = scmp.eq.s32.totalorder %s33, 3
    %p397 = por %p395, %p396
    %p399 = scmp.ne.s32.totalorder %s384, %s398
    %p400 = scmp.eq.s32.totalorder %s33, 0
    %p401 = por %p399, %p400
    %s403 = sadd.s32 %s402, 1
    %p406 = scmp.eq.s32.totalorder %s27, 3
    %p407 = scmp.ne.s32.totalorder %s402, %s404
    %p408 = scmp.eq.s32.totalorder %s27, 0
    %p409 = por %p407, %p408
    %p410 = scmp.ne.s32.totalorder %s402, %s404
    %p411 = scmp.eq.s32.totalorder %s32, 3
    %p412 = por %p410, %p411
    %p413 = scmp.ne.s32.totalorder %s404, %s405
    %p414 = scmp.eq.s32.totalorder %s32, 0
    %p415 = por %p413, %p414
    %p416 = scmp.ne.s32.totalorder %s404, %s405
    %p417 = scmp.eq.s32.totalorder %s33, 3
    %p418 = por %p416, %p417
    %p420 = scmp.ne.s32.totalorder %s405, %s419
    %p421 = scmp.eq.s32.totalorder %s33, 0
    %p422 = por %p420, %p421
    %s424 = sadd.s32 %s423, 1
    %p427 = scmp.eq.s32.totalorder %s27, 3
    %p428 = scmp.ne.s32.totalorder %s423, %s425
    %p429 = scmp.eq.s32.totalorder %s27, 0
    %p430 = por %p428, %p429
    %p431 = scmp.ne.s32.totalorder %s423, %s425
    %p432 = scmp.eq.s32.totalorder %s32, 3
    %p433 = por %p431, %p432
    %p434 = scmp.ne.s32.totalorder %s425, %s426
    %p435 = scmp.eq.s32.totalorder %s32, 0
    %p436 = por %p434, %p435
    %p437 = scmp.ne.s32.totalorder %s425, %s426
    %p438 = scmp.eq.s32.totalorder %s33, 3
    %p439 = por %p437, %p438
    %p441 = scmp.ne.s32.totalorder %s426, %s440
    %p442 = scmp.eq.s32.totalorder %s33, 0
    %p443 = por %p441, %p442
    %s444 = ssub.s32 %s27, %s34
    %p445 = scmp.eq.s32.totalorder %s444, 0
    %s447 = sadd.s32 %s446, 1
    %s448 = scalar_select %p445, %s446, %s447
    %p451 = pneg %p445
    %p452 = scmp.eq.s32.totalorder %s27, 3
    %p453 = por %p451, %p452
    %p454 = scmp.ne.s32.totalorder %s446, %s449
    %p455 = scmp.eq.s32.totalorder %s27, 0
    %p456 = por %p454, %p455
    %p457 = scmp.ne.s32.totalorder %s446, %s449
    %p458 = scmp.eq.s32.totalorder %s32, 3
    %p459 = por %p457, %p458
    %p460 = scmp.ne.s32.totalorder %s449, %s450
    %p461 = scmp.eq.s32.totalorder %s32, 0
    %p462 = por %p460, %p461
    %p463 = scmp.ne.s32.totalorder %s449, %s450
    %p464 = scmp.eq.s32.totalorder %s33, 3
    %p465 = por %p463, %p464
    %p467 = scmp.ne.s32.totalorder %s450, %s466
    %p468 = scmp.eq.s32.totalorder %s33, 0
    %p469 = por %p467, %p468
    %p470 = scmp.le.s32.totalorder 1, %s27
    %p471 = scmp.lt.s32.totalorder %s27, 5
    %p472 = pnand %p470, %p471
    %p473 = pneg %p472
    // Predicated region
    $region9: #{net_forward.1} parent=5 // pred_check
      _
    $region10: #{net_forward.1} parent=5 // pred_check_branch
      %475 = sbr.rel (%p472) target = $region12
    $region11: #{net_forward.1} parent=5 // pred_region
      %s476 = ssub.s32 %s27, 1
      // Predicated region
      $region13: #{net_forward.1} parent=11 // pred_check
        %p477 = pneg %p100
      $region14: #{net_forward.1} parent=11 // pred_check_branch
        %479 = sbr.rel (%p477) target = $region16
      $region15: #{net_forward.1} parent=11 // pred_region
        _
      $region16: #{net_forward.1} parent=11 // pred_fallthru
        _
      // Predicated region
      $region17: #{net_forward.1} parent=11 // pred_check
        %p480 = pneg %p121
      $region18: #{net_forward.1} parent=11 // pred_check_branch
        %482 = sbr.rel (%p480) target = $region20
      $region19: #{net_forward.1} parent=11 // pred_region
        _
      $region20: #{net_forward.1} parent=11 // pred_fallthru
        _
      // Predicated region
      $region21: #{net_forward.1} parent=11 // pred_check
        %p483 = pneg %p142
      $region22: #{net_forward.1} parent=11 // pred_check_branch
        %485 = sbr.rel (%p483) target = $region24
      $region23: #{net_forward.1} parent=11 // pred_region
        _
      $region24: #{net_forward.1} parent=11 // pred_fallthru
        _
      // Predicated region
      $region25: #{net_forward.1} parent=11 // pred_check
        %p486 = pneg %p163
      $region26: #{net_forward.1} parent=11 // pred_check_branch
        %488 = sbr.rel (%p486) target = $region28
      $region27: #{net_forward.1} parent=11 // pred_region
        _
      $region28: #{net_forward.1} parent=11 // pred_fallthru
        _
      // Predicated region
      $region29: #{net_forward.1} parent=11 // pred_check
        %p489 = pneg %p184
      $region30: #{net_forward.1} parent=11 // pred_check_branch
        %491 = sbr.rel (%p489) target = $region32
      $region31: #{net_forward.1} parent=11 // pred_region
        _
      $region32: #{net_forward.1} parent=11 // pred_fallthru
        _
      // Predicated region
      $region33: #{net_forward.1} parent=11 // pred_check
        %p492 = pneg %p205
      $region34: #{net_forward.1} parent=11 // pred_check_branch
        %494 = sbr.rel (%p492) target = $region36
      $region35: #{net_forward.1} parent=11 // pred_region
        _
      $region36: #{net_forward.1} parent=11 // pred_fallthru
        _
      // Predicated region
      $region37: #{net_forward.1} parent=11 // pred_check
        %p495 = pneg %p226
      $region38: #{net_forward.1} parent=11 // pred_check_branch
        %497 = sbr.rel (%p495) target = $region40
      $region39: #{net_forward.1} parent=11 // pred_region
        _
      $region40: #{net_forward.1} parent=11 // pred_fallthru
        _
      // Predicated region
      $region41: #{net_forward.1} parent=11 // pred_check
        %p498 = pneg %p247
      $region42: #{net_forward.1} parent=11 // pred_check_branch
        %500 = sbr.rel (%p498) target = $region44
      $region43: #{net_forward.1} parent=11 // pred_region
        _
      $region44: #{net_forward.1} parent=11 // pred_fallthru
        _
      // Predicated region
      $region45: #{net_forward.1} parent=11 // pred_check
        %p501 = pneg %p268
      $region46: #{net_forward.1} parent=11 // pred_check_branch
        %503 = sbr.rel (%p501) target = $region48
      $region47: #{net_forward.1} parent=11 // pred_region
        _
      $region48: #{net_forward.1} parent=11 // pred_fallthru
        _
      // Predicated region
      $region49: #{net_forward.1} parent=11 // pred_check
        %p504 = pneg %p289
      $region50: #{net_forward.1} parent=11 // pred_check_branch
        %506 = sbr.rel (%p504) target = $region52
      $region51: #{net_forward.1} parent=11 // pred_region
        _
      $region52: #{net_forward.1} parent=11 // pred_fallthru
        _
      // Predicated region
      $region53: #{net_forward.1} parent=11 // pred_check
        %p507 = pneg %p310
      $region54: #{net_forward.1} parent=11 // pred_check_branch
        %509 = sbr.rel (%p507) target = $region56
      $region55: #{net_forward.1} parent=11 // pred_region
        _
      $region56: #{net_forward.1} parent=11 // pred_fallthru
        _
      // Predicated region
      $region57: #{net_forward.1} parent=11 // pred_check
        %p510 = pneg %p331
      $region58: #{net_forward.1} parent=11 // pred_check_branch
        %512 = sbr.rel (%p510) target = $region60
      $region59: #{net_forward.1} parent=11 // pred_region
        _
      $region60: #{net_forward.1} parent=11 // pred_fallthru
        _
      // Predicated region
      $region61: #{net_forward.1} parent=11 // pred_check
        %p513 = pneg %p352
      $region62: #{net_forward.1} parent=11 // pred_check_branch
        %515 = sbr.rel (%p513) target = $region64
      $region63: #{net_forward.1} parent=11 // pred_region
        _
      $region64: #{net_forward.1} parent=11 // pred_fallthru
        _
      // Predicated region
      $region65: #{net_forward.1} parent=11 // pred_check
        %p516 = pneg %p373
      $region66: #{net_forward.1} parent=11 // pred_check_branch
        %518 = sbr.rel (%p516) target = $region68
      $region67: #{net_forward.1} parent=11 // pred_region
        _
      $region68: #{net_forward.1} parent=11 // pred_fallthru
        _
      // Predicated region
      $region69: #{net_forward.1} parent=11 // pred_check
        %p519 = pneg %p394
      $region70: #{net_forward.1} parent=11 // pred_check_branch
        %521 = sbr.rel (%p519) target = $region72
      $region71: #{net_forward.1} parent=11 // pred_region
        _
      $region72: #{net_forward.1} parent=11 // pred_fallthru
        _
      // Predicated region
      $region73: #{net_forward.1} parent=11 // pred_check
        %p522 = pneg %p415
      $region74: #{net_forward.1} parent=11 // pred_check_branch
        %524 = sbr.rel (%p522) target = $region76
      $region75: #{net_forward.1} parent=11 // pred_region
        _
      $region76: #{net_forward.1} parent=11 // pred_fallthru
        _
      // Predicated region
      $region77: #{net_forward.1} parent=11 // pred_check
        %p525 = pneg %p436
      $region78: #{net_forward.1} parent=11 // pred_check_branch
        %527 = sbr.rel (%p525) target = $region80
      $region79: #{net_forward.1} parent=11 // pred_region
        _
      $region80: #{net_forward.1} parent=11 // pred_fallthru
        _
    $region12: #{net_forward.1} parent=5 // pred_fallthru
      _
    %p528 = scmp.lt.s32.totalorder %s27, 4
    // Predicated region
    $region81: #{net_forward.1} parent=5 // pred_check
      %p529 = pneg %p528
    $region82: #{net_forward.1} parent=5 // pred_check_branch
      %531 = sbr.rel (%p529) target = $region84
    $region83: #{net_forward.1} parent=5 // pred_region
      // Predicated region
      $region85: #{net_forward.1} parent=83 // pred_check
        %p532 = pneg %p47
      $region86: #{net_forward.1} parent=83 // pred_check_branch
        %534 = sbr.rel (%p532) target = $region88
      $region87: #{net_forward.1} parent=83 // pred_region
        %s535 = smul.u32 2, %s27
        %p536 = scmp.lt.s32.totalorder %s535, 7
        %s537 = scalar_select %p536, %s535, 7
        %s538 = scalar_lea.vmem %s0, %s537
        %s539 = smul.u32 2, %s27
      $region88: #{net_forward.1} parent=83 // pred_fallthru
        _
      // Predicated region
      $region89: #{net_forward.1} parent=83 // pred_check
        %p540 = pneg %p73
      $region90: #{net_forward.1} parent=83 // pred_check_branch
        %542 = sbr.rel (%p540) target = $region92
      $region91: #{net_forward.1} parent=83 // pred_region
        %s543 = smul.u32 2, %s27
        %p544 = scmp.lt.s32.totalorder %s543, 7
        %s545 = scalar_select %p544, %s543, 7
        %s546 = scalar_lea.vmem %s1, %s545
        %s547 = smul.u32 2, %s27
      $region92: #{net_forward.1} parent=83 // pred_fallthru
        _
    $region84: #{net_forward.1} parent=5 // pred_fallthru
      _
    %p548 = scmp.le.s32.totalorder 1, %s27
    %p549 = scmp.lt.s32.totalorder %s27, 5
    %p550 = pnand %p548, %p549
    %p551 = pneg %p550
    // Predicated region
    $region93: #{net_forward.1} parent=5 // pred_check
      _
    $region94: #{net_forward.1} parent=5 // pred_check_branch
      %553 = sbr.rel (%p550) target = $region96
    $region95: #{net_forward.1} parent=5 // pred_region
      %s554 = ssub.s32 %s27, 1
      %s555 = smul.u32 2, %s32
      %p556 = scmp.lt.s32.totalorder %s555, 7
      %s557 = scalar_select %p556, %s555, 7
      %s558 = scalar_lea.vmem %s0, %s557
      %p559 = pneg %p53
      %p560 = pneg %p50
      %s561 = smul.u32 2, %s32
      %p562 = scmp.lt.s32.totalorder %s561, 7
      %s563 = scalar_select %p562, %s561, 7
      %s564 = scalar_lea.vmem %s1, %s563
      %p565 = pneg %p79
      %p566 = pneg %p76
      %p567 = pneg %p100
      %p568 = pneg %p97
      %p569 = pneg %p121
      %p570 = pneg %p118
      %p571 = pneg %p142
      %p572 = pneg %p139
      %p573 = pneg %p163
      %p574 = pneg %p160
      %p575 = pneg %p184
      %p576 = pneg %p181
      %p577 = pneg %p205
      %p578 = pneg %p202
      %p579 = pneg %p226
      %p580 = pneg %p223
      %p581 = pneg %p247
      %p582 = pneg %p244
      %p583 = pneg %p268
      %p584 = pneg %p265
      %p585 = pneg %p289
      %p586 = pneg %p286
      %p587 = pneg %p310
      %p588 = pneg %p307
      %p589 = pneg %p331
      %p590 = pneg %p328
      %p591 = pneg %p352
      %p592 = pneg %p349
      %p593 = pneg %p373
      %p594 = pneg %p370
      %p595 = pneg %p394
      %p596 = pneg %p391
      %p597 = pneg %p415
      %p598 = pneg %p412
      %p599 = pneg %p436
      %p600 = pneg %p433
      %p601 = pneg %p462
      %p602 = pneg %p459
      %s603 = smul.u32 2, %s32
      %p604 = scmp.lt.s32.totalorder %s603, 7
      %s605 = scalar_select %p604, %s603, 7
      %s606 = scalar_lea.vmem %s19, %s605
      %s607 = smul.u32 2, %s32
      %p608 = scmp.lt.s32.totalorder %s607, 7
      %s609 = scalar_select %p608, %s607, 7
      %s610 = scalar_lea.vmem %s0, %s609
      %s611 = smul.u32 2, %s32
      %s612 = smul.u32 2, %s32
      %p613 = scmp.lt.s32.totalorder %s612, 7
      %s614 = scalar_select %p613, %s612, 7
      %s615 = scalar_lea.vmem %s1, %s614
      %s616 = smul.u32 2, %s32
      %s617 = smul.u32 2, %s32
      %p618 = scmp.lt.s32.totalorder %s617, 7
      %s619 = scalar_select %p618, %s617, 7
      %s620 = scalar_lea.vmem %s19, %s619
      %s621 = smul.u32 2, %s32
      %v622 = vld [vmem:[%s610] sm:$0x3]
      %v623 = vld [vmem:[%s615] sm:$0x3]
      %v624 = vld [vmem:[%s2] sm:$0xff]
      %v625 = vld [vmem:[%s2 + $0x8] sm:$0xff]
      %v626 = vld [vmem:[%s2 + $0x10] sm:$0xff]
      %v627 = vld [vmem:[%s2 + $0x18] sm:$0xff]
      %629 = vset.pattern.permute.xlu0 0
      %630 = vperm.xlu0 %629, %v624
      %v631 = vpop.permute.xlu0 %630
      %634 = vset.pattern.permute.xlu0 0
      %635 = vperm.xlu0 %634, %v625
      %v636 = vpop.permute.xlu0 %635
      %639 = vset.pattern.permute.xlu0 0
      %640 = vperm.xlu0 %639, %v626
      %v641 = vpop.permute.xlu0 %640
      %644 = vset.pattern.permute.xlu0 0
      %645 = vperm.xlu0 %644, %v627
      %v646 = vpop.permute.xlu0 %645
      %v649 = vlaneseq
      %v650 = vshrl.u32 %v649, 7
      %v651 = vsub.s32 0, %v650
      %v652 = vrot.slane %v622, %v651
      %v653 = vlaneseq
      %v654 = vshrl.u32 %v653, 7
      %v655 = vsub.s32 1, %v654
      %v656 = vrot.slane %v622, %v655
      %v659 = vmul.f32 %v631, %v652
      %v660 = vmul.f32 %v631, %v656
      %v661 = vmul.f32 %v636, %v652
      %v662 = vmul.f32 %v636, %v656
      %v663 = vmul.f32 %v641, %v652
      %v664 = vmul.f32 %v641, %v656
      %v665 = vmul.f32 %v646, %v652
      %v666 = vmul.f32 %v646, %v656
      %v667 = vld [vmem:[%s3] sm:$0xff]
      %v668 = vld [vmem:[%s3 + $0x8] sm:$0xff]
      %v669 = vld [vmem:[%s3 + $0x10] sm:$0xff]
      %v670 = vld [vmem:[%s3 + $0x18] sm:$0xff]
      %672 = vset.pattern.permute.xlu0 0
      %673 = vperm.xlu0 %672, %v667
      %v674 = vpop.permute.xlu0 %673
      %677 = vset.pattern.permute.xlu0 0
      %678 = vperm.xlu0 %677, %v668
      %v679 = vpop.permute.xlu0 %678
      %682 = vset.pattern.permute.xlu0 0
      %683 = vperm.xlu0 %682, %v669
      %v684 = vpop.permute.xlu0 %683
      %687 = vset.pattern.permute.xlu0 0
      %688 = vperm.xlu0 %687, %v670
      %v689 = vpop.permute.xlu0 %688
      %v692 = vlaneseq
      %v693 = vshrl.u32 %v692, 7
      %v694 = vsub.s32 0, %v693
      %v695 = vrot.slane %v623, %v694
      %v696 = vlaneseq
      %v697 = vshrl.u32 %v696, 7
      %v698 = vsub.s32 1, %v697
      %v699 = vrot.slane %v623, %v698
      %v702 = vmul.f32 %v674, %v695
      %v703 = vmul.f32 %v674, %v699
      %v704 = vmul.f32 %v679, %v695
      %v705 = vmul.f32 %v679, %v699
      %v706 = vmul.f32 %v684, %v695
      %v707 = vmul.f32 %v684, %v699
      %v708 = vmul.f32 %v689, %v695
      %v709 = vmul.f32 %v689, %v699
      %v710 = vadd.f32 %v659, %v702
      %v711 = vadd.f32 %v660, %v703
      %v712 = vadd.f32 %v661, %v704
      %v713 = vadd.f32 %v662, %v705
      %v714 = vadd.f32 %v663, %v706
      %v715 = vadd.f32 %v664, %v707
      %v716 = vadd.f32 %v665, %v708
      %v717 = vadd.f32 %v666, %v709
      %v718 = vld [vmem:[%s4] sm:$0xff]
      %v719 = vld [vmem:[%s4 + $0x8] sm:$0xff]
      %v720 = vld [vmem:[%s4 + $0x10] sm:$0xff]
      %v721 = vld [vmem:[%s4 + $0x18] sm:$0xff]
      %723 = vset.pattern.permute.xlu0 0
      %724 = vperm.xlu0 %723, %v718
      %v725 = vpop.permute.xlu0 %724
      %728 = vset.pattern.permute.xlu0 0
      %729 = vperm.xlu0 %728, %v719
      %v730 = vpop.permute.xlu0 %729
      %733 = vset.pattern.permute.xlu0 0
      %734 = vperm.xlu0 %733, %v720
      %v735 = vpop.permute.xlu0 %734
      %738 = vset.pattern.permute.xlu0 0
      %739 = vperm.xlu0 %738, %v721
      %v740 = vpop.permute.xlu0 %739
      %v742 = vadd.f32 %v710, %v725
      %v743 = vadd.f32 %v711, %v725
      %v744 = vadd.f32 %v712, %v730
      %v745 = vadd.f32 %v713, %v730
      %v746 = vadd.f32 %v714, %v735
      %v747 = vadd.f32 %v715, %v735
      %v748 = vadd.f32 %v716, %v740
      %v749 = vadd.f32 %v717, %v740
      %vm750 = vcmp.gt.f32.partialorder %v742, 20.0
      %vm751 = vcmp.gt.f32.partialorder %v743, 20.0
      %vm752 = vcmp.gt.f32.partialorder %v744, 20.0
      %vm753 = vcmp.gt.f32.partialorder %v745, 20.0
      %vm754 = vcmp.gt.f32.partialorder %v746, 20.0
      %vm755 = vcmp.gt.f32.partialorder %v747, 20.0
      %vm756 = vcmp.gt.f32.partialorder %v748, 20.0
      %vm757 = vcmp.gt.f32.partialorder %v749, 20.0
      %v758 = vmin.f32 %v742, 20.0
      %v759 = vmin.f32 %v743, 20.0
      %v760 = vmin.f32 %v744, 20.0
      %v761 = vmin.f32 %v745, 20.0
      %v762 = vmin.f32 %v746, 20.0
      %v763 = vmin.f32 %v747, 20.0
      %v764 = vmin.f32 %v748, 20.0
      %v765 = vmin.f32 %v749, 20.0
      %v766 = vmul.f32 %v758, 1.442695
      %v767 = vpow.pop %v766
      %v768 = vmul.f32 %v759, 1.442695
      %v769 = vpow.pop %v768
      %v770 = vmul.f32 %v760, 1.442695
      %v771 = vpow.pop %v770
      %v772 = vmul.f32 %v761, 1.442695
      %v773 = vpow.pop %v772
      %v774 = vmul.f32 %v762, 1.442695
      %v775 = vpow.pop %v774
      %v776 = vmul.f32 %v763, 1.442695
      %v777 = vpow.pop %v776
      %v778 = vmul.f32 %v764, 1.442695
      %v779 = vpow.pop %v778
      %v780 = vmul.f32 %v765, 1.442695
      %v781 = vpow.pop %v780
      %v782 = vadd.f32 %v767, 1.0
      %v783 = vlog2.pop %v782
      %v784 = vmul.f32 %v783, 0.6931472
      %v785 = vmul.f32 -0.5, %v767
      %v786 = vadd.f32 %v785, 1.0
      %v787 = vmul.f32 %v786, %v767
      %v788 = vand.u32 2147483647, %v767
      %vm789 = vcmp.lt.f32.partialorder %v788, 0.0004427343
      %v790 = vsel %vm789, %v787, %v784
      %v791 = vadd.f32 %v769, 1.0
      %v792 = vlog2.pop %v791
      %v793 = vmul.f32 %v792, 0.6931472
      %v794 = vmul.f32 -0.5, %v769
      %v795 = vadd.f32 %v794, 1.0
      %v796 = vmul.f32 %v795, %v769
      %v797 = vand.u32 2147483647, %v769
      %vm798 = vcmp.lt.f32.partialorder %v797, 0.0004427343
      %v799 = vsel %vm798, %v796, %v793
      %v800 = vadd.f32 %v771, 1.0
      %v801 = vlog2.pop %v800
      %v802 = vmul.f32 %v801, 0.6931472
      %v803 = vmul.f32 -0.5, %v771
      %v804 = vadd.f32 %v803, 1.0
      %v805 = vmul.f32 %v804, %v771
      %v806 = vand.u32 2147483647, %v771
      %vm807 = vcmp.lt.f32.partialorder %v806, 0.0004427343
      %v808 = vsel %vm807, %v805, %v802
      %v809 = vadd.f32 %v773, 1.0
      %v810 = vlog2.pop %v809
      %v811 = vmul.f32 %v810, 0.6931472
      %v812 = vmul.f32 -0.5, %v773
      %v813 = vadd.f32 %v812, 1.0
      %v814 = vmul.f32 %v813, %v773
      %v815 = vand.u32 2147483647, %v773
      %vm816 = vcmp.lt.f32.partialorder %v815, 0.0004427343
      %v817 = vsel %vm816, %v814, %v811
      %v818 = vadd.f32 %v775, 1.0
      %v819 = vlog2.pop %v818
      %v820 = vmul.f32 %v819, 0.6931472
      %v821 = vmul.f32 -0.5, %v775
      %v822 = vadd.f32 %v821, 1.0
      %v823 = vmul.f32 %v822, %v775
      %v824 = vand.u32 2147483647, %v775
      %vm825 = vcmp.lt.f32.partialorder %v824, 0.0004427343
      %v826 = vsel %vm825, %v823, %v820
      %v827 = vadd.f32 %v777, 1.0
      %v828 = vlog2.pop %v827
      %v829 = vmul.f32 %v828, 0.6931472
      %v830 = vmul.f32 -0.5, %v777
      %v831 = vadd.f32 %v830, 1.0
      %v832 = vmul.f32 %v831, %v777
      %v833 = vand.u32 2147483647, %v777
      %vm834 = vcmp.lt.f32.partialorder %v833, 0.0004427343
      %v835 = vsel %vm834, %v832, %v829
      %v836 = vadd.f32 %v779, 1.0
      %v837 = vlog2.pop %v836
      %v838 = vmul.f32 %v837, 0.6931472
      %v839 = vmul.f32 -0.5, %v779
      %v840 = vadd.f32 %v839, 1.0
      %v841 = vmul.f32 %v840, %v779
      %v842 = vand.u32 2147483647, %v779
      %vm843 = vcmp.lt.f32.partialorder %v842, 0.0004427343
      %v844 = vsel %vm843, %v841, %v838
      %v845 = vadd.f32 %v781, 1.0
      %v846 = vlog2.pop %v845
      %v847 = vmul.f32 %v846, 0.6931472
      %v848 = vmul.f32 -0.5, %v781
      %v849 = vadd.f32 %v848, 1.0
      %v850 = vmul.f32 %v849, %v781
      %v851 = vand.u32 2147483647, %v781
      %vm852 = vcmp.lt.f32.partialorder %v851, 0.0004427343
      %v853 = vsel %vm852, %v850, %v847
      %v854 = vsel %vm750, %v742, %v790
      %v855 = vsel %vm751, %v743, %v799
      %v856 = vsel %vm752, %v744, %v808
      %v857 = vsel %vm753, %v745, %v817
      %v858 = vsel %vm754, %v746, %v826
      %v859 = vsel %vm755, %v747, %v835
      %v860 = vsel %vm756, %v748, %v844
      %v861 = vsel %vm757, %v749, %v853
      %v862 = vld [vmem:[%s5] sm:$0xff]
      %v863 = vld [vmem:[%s5 + $0x8] sm:$0xff]
      %v864 = vld [vmem:[%s5 + $0x10] sm:$0xff]
      %v865 = vld [vmem:[%s5 + $0x18] sm:$0xff]
      %v866 = vld [vmem:[%s6] sm:$0xff]
      %v867 = vld [vmem:[%s6 + $0x8] sm:$0xff]
      %v868 = vld [vmem:[%s6 + $0x10] sm:$0xff]
      %v869 = vld [vmem:[%s6 + $0x18] sm:$0xff]
      %871 = vset.pattern.permute.xlu0 0
      %872 = vperm.xlu0 %871, %v866
      %v873 = vpop.permute.xlu0 %872
      %876 = vset.pattern.permute.xlu0 0
      %877 = vperm.xlu0 %876, %v867
      %v878 = vpop.permute.xlu0 %877
      %881 = vset.pattern.permute.xlu0 0
      %882 = vperm.xlu0 %881, %v868
      %v883 = vpop.permute.xlu0 %882
      %886 = vset.pattern.permute.xlu0 0
      %887 = vperm.xlu0 %886, %v869
      %v888 = vpop.permute.xlu0 %887
      %vm890 = vcmask 261120
      %v892 = vsel %vm890, %v862, 0
      %v895 = vsel %vm890, %v863, 0
      %v898 = vsel %vm890, %v864, 0
      %v901 = vsel %vm890, %v865, 0
      %903 = vmatprep.subr.mxu0 0.0
      %904 = vmatpush1.msra.mxu0 0.0
      %905 = vmatprep.subr.mxu0 0.0
      %906 = vmatpush1.msra.mxu0 0.0
      %907 = vmatprep.subr.mxu0 0.0
      %908 = vmatpush1.msra.mxu0 0.0
      %909 = vmatprep.subr.mxu0 0.0
      %910 = vmatpush1.msra.mxu0 0.0
      %911 = vmatprep.subr.mxu0 0.0
      %912 = vmatpush1.msra.mxu0 0.0
      %913 = vmatprep.subr.mxu0 0.0
      %914 = vmatpush1.msra.mxu0 0.0
      %915 = vmatprep.subr.mxu0 0.0
      %916 = vmatpush1.msra.mxu0 0.0
      %917 = vmatprep.subr.mxu0 0.0
      %918 = vmatpush1.msra.mxu0 0.0
      %919 = vmatprep.subr.mxu0 0.0
      %920 = vmatpush1.msra.mxu0 0.0
      %921 = vmatprep.subr.mxu0 0.0
      %922 = vmatpush1.msra.mxu0 0.0
      %923 = vmatprep.subr.mxu0 0.0
      %924 = vmatpush1.msra.mxu0 0.0
      %925 = vmatprep.subr.mxu0 0.0
      %926 = vmatpush1.msra.mxu0 0.0
      %927 = vmatprep.subr.mxu0 %v861
      %928 = vmatpush1.msra.mxu0 %v860
      %929 = vmatprep.subr.mxu0 %v859
      %930 = vmatpush1.msra.mxu0 %v858
      %931 = vmatprep.subr.mxu0 %v857
      %932 = vmatpush1.msra.mxu0 %v856
      %933 = vmatprep.subr.mxu0 %v855
      %934 = vmatpush1.msra.mxu0 %v854
      %935 = vmatprep.subr.mxu0 0.0
      %936 = vmatpush2.msra.mxu0 0.0
      %937 = vmatprep.subr.mxu0 0.0
      %938 = vmatpush2.msra.mxu0 0.0
      %939 = vmatprep.subr.mxu0 0.0
      %940 = vmatpush2.msra.mxu0 0.0
      %941 = vmatprep.subr.mxu0 0.0
      %942 = vmatpush2.msra.mxu0 0.0
      %943 = vmatprep.subr.mxu0 0.0
      %944 = vmatpush2.msra.mxu0 0.0
      %945 = vmatprep.subr.mxu0 0.0
      %946 = vmatpush2.msra.mxu0 0.0
      %947 = vmatprep.subr.mxu0 0.0
      %948 = vmatpush2.msra.mxu0 0.0
      %949 = vmatprep.subr.mxu0 0.0
      %950 = vmatpush2.msra.mxu0 0.0
      %951 = vmatprep.subr.mxu0 0.0
      %952 = vmatpush2.msra.mxu0 0.0
      %953 = vmatprep.subr.mxu0 0.0
      %954 = vmatpush2.msra.mxu0 0.0
      %955 = vmatprep.subr.mxu0 0.0
      %956 = vmatpush2.msra.mxu0 0.0
      %957 = vmatprep.subr.mxu0 0.0
      %958 = vmatpush2.msra.mxu0 0.0
      %959 = vmatprep.subr.mxu0 0.0
      %960 = vmatpush2.msra.mxu0 0.0
      %961 = vmatprep.subr.mxu0 0.0
      %962 = vmatpush2.msra.mxu0 0.0
      %963 = vmatprep.subr.mxu0 0.0
      %964 = vmatpush2.msra.mxu0 0.0
      %965 = vmatprep.subr.mxu0 0.0
      %966 = vmatpush2.msra.mxu0 0.0
      %967 = vmatprep.mubr.f32.mxu0 0.0
      %968 = vmatmul.mubr.f32.gmra.mxu0 %v892
      %v969 = vpop.f32.mrf.mxu0
      %v970 = vadd.f32 %v873, %v969
      %v971 = vpop.f32.mrf.mxu0
      %v972 = vadd.f32 %v873, %v971
      %973 = vmatprep.mubr.f32.mxu0 0.0
      %974 = vmatmul.mubr.f32.gmra.mxu0 %v895
      %v975 = vpop.f32.mrf.mxu0
      %v976 = vadd.f32 %v878, %v975
      %v977 = vpop.f32.mrf.mxu0
      %v978 = vadd.f32 %v878, %v977
      %979 = vmatprep.mubr.f32.mxu0 0.0
      %980 = vmatmul.mubr.f32.gmra.mxu0 %v898
      %v981 = vpop.f32.mrf.mxu0
      %v982 = vadd.f32 %v883, %v981
      %v983 = vpop.f32.mrf.mxu0
      %v984 = vadd.f32 %v883, %v983
      %985 = vmatprep.mubr.f32.mxu0 0.0
      %986 = vmatmul.mubr.f32.gmra.mxu0 %v901
      %v987 = vpop.f32.mrf.mxu0
      %v988 = vadd.f32 %v888, %v987
      %v989 = vpop.f32.mrf.mxu0
      %v990 = vadd.f32 %v888, %v989
      %991 = vdwg.mxu0
      %vm992 = vcmp.gt.f32.partialorder %v970, 20.0
      %vm993 = vcmp.gt.f32.partialorder %v972, 20.0
      %vm994 = vcmp.gt.f32.partialorder %v976, 20.0
      %vm995 = vcmp.gt.f32.partialorder %v978, 20.0
      %vm996 = vcmp.gt.f32.partialorder %v982, 20.0
      %vm997 = vcmp.gt.f32.partialorder %v984, 20.0
      %vm998 = vcmp.gt.f32.partialorder %v988, 20.0
      %vm999 = vcmp.gt.f32.partialorder %v990, 20.0
      %v1000 = vmin.f32 %v970, 20.0
      %v1001 = vmin.f32 %v972, 20.0
      %v1002 = vmin.f32 %v976, 20.0
      %v1003 = vmin.f32 %v978, 20.0
      %v1004 = vmin.f32 %v982, 20.0
      %v1005 = vmin.f32 %v984, 20.0
      %v1006 = vmin.f32 %v988, 20.0
      %v1007 = vmin.f32 %v990, 20.0
      %v1008 = vmul.f32 %v1000, 1.442695
      %v1009 = vpow.pop %v1008
      %v1010 = vmul.f32 %v1001, 1.442695
      %v1011 = vpow.pop %v1010
      %v1012 = vmul.f32 %v1002, 1.442695
      %v1013 = vpow.pop %v1012
      %v1014 = vmul.f32 %v1003, 1.442695
      %v1015 = vpow.pop %v1014
      %v1016 = vmul.f32 %v1004, 1.442695
      %v1017 = vpow.pop %v1016
      %v1018 = vmul.f32 %v1005, 1.442695
      %v1019 = vpow.pop %v1018
      %v1020 = vmul.f32 %v1006, 1.442695
      %v1021 = vpow.pop %v1020
      %v1022 = vmul.f32 %v1007, 1.442695
      %v1023 = vpow.pop %v1022
      %v1024 = vadd.f32 %v1009, 1.0
      %v1025 = vlog2.pop %v1024
      %v1026 = vmul.f32 %v1025, 0.6931472
      %v1027 = vmul.f32 -0.5, %v1009
      %v1028 = vadd.f32 %v1027, 1.0
      %v1029 = vmul.f32 %v1028, %v1009
      %v1030 = vand.u32 2147483647, %v1009
      %vm1031 = vcmp.lt.f32.partialorder %v1030, 0.0004427343
      %v1032 = vsel %vm1031, %v1029, %v1026
      %v1033 = vadd.f32 %v1011, 1.0
      %v1034 = vlog2.pop %v1033
      %v1035 = vmul.f32 %v1034, 0.6931472
      %v1036 = vmul.f32 -0.5, %v1011
      %v1037 = vadd.f32 %v1036, 1.0
      %v1038 = vmul.f32 %v1037, %v1011
      %v1039 = vand.u32 2147483647, %v1011
      %vm1040 = vcmp.lt.f32.partialorder %v1039, 0.0004427343
      %v1041 = vsel %vm1040, %v1038, %v1035
      %v1042 = vadd.f32 %v1013, 1.0
      %v1043 = vlog2.pop %v1042
      %v1044 = vmul.f32 %v1043, 0.6931472
      %v1045 = vmul.f32 -0.5, %v1013
      %v1046 = vadd.f32 %v1045, 1.0
      %v1047 = vmul.f32 %v1046, %v1013
      %v1048 = vand.u32 2147483647, %v1013
      %vm1049 = vcmp.lt.f32.partialorder %v1048, 0.0004427343
      %v1050 = vsel %vm1049, %v1047, %v1044
      %v1051 = vadd.f32 %v1015, 1.0
      %v1052 = vlog2.pop %v1051
      %v1053 = vmul.f32 %v1052, 0.6931472
      %v1054 = vmul.f32 -0.5, %v1015
      %v1055 = vadd.f32 %v1054, 1.0
      %v1056 = vmul.f32 %v1055, %v1015
      %v1057 = vand.u32 2147483647, %v1015
      %vm1058 = vcmp.lt.f32.partialorder %v1057, 0.0004427343
      %v1059 = vsel %vm1058, %v1056, %v1053
      %v1060 = vadd.f32 %v1017, 1.0
      %v1061 = vlog2.pop %v1060
      %v1062 = vmul.f32 %v1061, 0.6931472
      %v1063 = vmul.f32 -0.5, %v1017
      %v1064 = vadd.f32 %v1063, 1.0
      %v1065 = vmul.f32 %v1064, %v1017
      %v1066 = vand.u32 2147483647, %v1017
      %vm1067 = vcmp.lt.f32.partialorder %v1066, 0.0004427343
      %v1068 = vsel %vm1067, %v1065, %v1062
      %v1069 = vadd.f32 %v1019, 1.0
      %v1070 = vlog2.pop %v1069
      %v1071 = vmul.f32 %v1070, 0.6931472
      %v1072 = vmul.f32 -0.5, %v1019
      %v1073 = vadd.f32 %v1072, 1.0
      %v1074 = vmul.f32 %v1073, %v1019
      %v1075 = vand.u32 2147483647, %v1019
      %vm1076 = vcmp.lt.f32.partialorder %v1075, 0.0004427343
      %v1077 = vsel %vm1076, %v1074, %v1071
      %v1078 = vadd.f32 %v1021, 1.0
      %v1079 = vlog2.pop %v1078
      %v1080 = vmul.f32 %v1079, 0.6931472
      %v1081 = vmul.f32 -0.5, %v1021
      %v1082 = vadd.f32 %v1081, 1.0
      %v1083 = vmul.f32 %v1082, %v1021
      %v1084 = vand.u32 2147483647, %v1021
      %vm1085 = vcmp.lt.f32.partialorder %v1084, 0.0004427343
      %v1086 = vsel %vm1085, %v1083, %v1080
      %v1087 = vadd.f32 %v1023, 1.0
      %v1088 = vlog2.pop %v1087
      %v1089 = vmul.f32 %v1088, 0.6931472
      %v1090 = vmul.f32 -0.5, %v1023
      %v1091 = vadd.f32 %v1090, 1.0
      %v1092 = vmul.f32 %v1091, %v1023
      %v1093 = vand.u32 2147483647, %v1023
      %vm1094 = vcmp.lt.f32.partialorder %v1093, 0.0004427343
      %v1095 = vsel %vm1094, %v1092, %v1089
      %v1096 = vsel %vm992, %v970, %v1032
      %v1097 = vsel %vm993, %v972, %v1041
      %v1098 = vsel %vm994, %v976, %v1050
      %v1099 = vsel %vm995, %v978, %v1059
      %v1100 = vsel %vm996, %v982, %v1068
      %v1101 = vsel %vm997, %v984, %v1077
      %v1102 = vsel %vm998, %v988, %v1086
      %v1103 = vsel %vm999, %v990, %v1095
      %v1104 = vld [vmem:[%s7] sm:$0xff]
      %v1105 = vld [vmem:[%s7 + $0x8] sm:$0xff]
      %v1106 = vld [vmem:[%s7 + $0x10] sm:$0xff]
      %v1107 = vld [vmem:[%s7 + $0x18] sm:$0xff]
      %v1108 = vld [vmem:[%s8] sm:$0xff]
      %v1109 = vld [vmem:[%s8 + $0x8] sm:$0xff]
      %v1110 = vld [vmem:[%s8 + $0x10] sm:$0xff]
      %v1111 = vld [vmem:[%s8 + $0x18] sm:$0xff]
      %1113 = vset.pattern.permute.xlu0 0
      %1114 = vperm.xlu0 %1113, %v1108
      %v1115 = vpop.permute.xlu0 %1114
      %1118 = vset.pattern.permute.xlu0 0
      %1119 = vperm.xlu0 %1118, %v1109
      %v1120 = vpop.permute.xlu0 %1119
      %1123 = vset.pattern.permute.xlu0 0
      %1124 = vperm.xlu0 %1123, %v1110
      %v1125 = vpop.permute.xlu0 %1124
      %1128 = vset.pattern.permute.xlu0 0
      %1129 = vperm.xlu0 %1128, %v1111
      %v1130 = vpop.permute.xlu0 %1129
      %v1133 = vsel %vm890, %v1104, 0
      %v1136 = vsel %vm890, %v1105, 0
      %v1139 = vsel %vm890, %v1106, 0
      %v1142 = vsel %vm890, %v1107, 0
      %1144 = vmatprep.subr.mxu0 0.0
      %1145 = vmatpush1.msra.mxu0 0.0
      %1146 = vmatprep.subr.mxu0 0.0
      %1147 = vmatpush1.msra.mxu0 0.0
      %1148 = vmatprep.subr.mxu0 0.0
      %1149 = vmatpush1.msra.mxu0 0.0
      %1150 = vmatprep.subr.mxu0 0.0
      %1151 = vmatpush1.msra.mxu0 0.0
      %1152 = vmatprep.subr.mxu0 0.0
      %1153 = vmatpush1.msra.mxu0 0.0
      %1154 = vmatprep.subr.mxu0 0.0
      %1155 = vmatpush1.msra.mxu0 0.0
      %1156 = vmatprep.subr.mxu0 0.0
      %1157 = vmatpush1.msra.mxu0 0.0
      %1158 = vmatprep.subr.mxu0 0.0
      %1159 = vmatpush1.msra.mxu0 0.0
      %1160 = vmatprep.subr.mxu0 0.0
      %1161 = vmatpush1.msra.mxu0 0.0
      %1162 = vmatprep.subr.mxu0 0.0
      %1163 = vmatpush1.msra.mxu0 0.0
      %1164 = vmatprep.subr.mxu0 0.0
      %1165 = vmatpush1.msra.mxu0 0.0
      %1166 = vmatprep.subr.mxu0 0.0
      %1167 = vmatpush1.msra.mxu0 0.0
      %1168 = vmatprep.subr.mxu0 %v1103
      %1169 = vmatpush1.msra.mxu0 %v1102
      %1170 = vmatprep.subr.mxu0 %v1101
      %1171 = vmatpush1.msra.mxu0 %v1100
      %1172 = vmatprep.subr.mxu0 %v1099
      %1173 = vmatpush1.msra.mxu0 %v1098
      %1174 = vmatprep.subr.mxu0 %v1097
      %1175 = vmatpush1.msra.mxu0 %v1096
      %1176 = vmatprep.subr.mxu0 0.0
      %1177 = vmatpush2.msra.mxu0 0.0
      %1178 = vmatprep.subr.mxu0 0.0
      %1179 = vmatpush2.msra.mxu0 0.0
      %1180 = vmatprep.subr.mxu0 0.0
      %1181 = vmatpush2.msra.mxu0 0.0
      %1182 = vmatprep.subr.mxu0 0.0
      %1183 = vmatpush2.msra.mxu0 0.0
      %1184 = vmatprep.subr.mxu0 0.0
      %1185 = vmatpush2.msra.mxu0 0.0
      %1186 = vmatprep.subr.mxu0 0.0
      %1187 = vmatpush2.msra.mxu0 0.0
      %1188 = vmatprep.subr.mxu0 0.0
      %1189 = vmatpush2.msra.mxu0 0.0
      %1190 = vmatprep.subr.mxu0 0.0
      %1191 = vmatpush2.msra.mxu0 0.0
      %1192 = vmatprep.subr.mxu0 0.0
      %1193 = vmatpush2.msra.mxu0 0.0
      %1194 = vmatprep.subr.mxu0 0.0
      %1195 = vmatpush2.msra.mxu0 0.0
      %1196 = vmatprep.subr.mxu0 0.0
      %1197 = vmatpush2.msra.mxu0 0.0
      %1198 = vmatprep.subr.mxu0 0.0
      %1199 = vmatpush2.msra.mxu0 0.0
      %1200 = vmatprep.subr.mxu0 0.0
      %1201 = vmatpush2.msra.mxu0 0.0
      %1202 = vmatprep.subr.mxu0 0.0
      %1203 = vmatpush2.msra.mxu0 0.0
      %1204 = vmatprep.subr.mxu0 0.0
      %1205 = vmatpush2.msra.mxu0 0.0
      %1206 = vmatprep.subr.mxu0 0.0
      %1207 = vmatpush2.msra.mxu0 0.0
      %1208 = vmatprep.mubr.f32.mxu0 0.0
      %1209 = vmatmul.mubr.f32.gmra.mxu0 %v1133
      %v1210 = vpop.f32.mrf.mxu0
      %v1211 = vadd.f32 %v1115, %v1210
      %v1212 = vpop.f32.mrf.mxu0
      %v1213 = vadd.f32 %v1115, %v1212
      %1214 = vmatprep.mubr.f32.mxu0 0.0
      %1215 = vmatmul.mubr.f32.gmra.mxu0 %v1136
      %v1216 = vpop.f32.mrf.mxu0
      %v1217 = vadd.f32 %v1120, %v1216
      %v1218 = vpop.f32.mrf.mxu0
      %v1219 = vadd.f32 %v1120, %v1218
      %1220 = vmatprep.mubr.f32.mxu0 0.0
      %1221 = vmatmul.mubr.f32.gmra.mxu0 %v1139
      %v1222 = vpop.f32.mrf.mxu0
      %v1223 = vadd.f32 %v1125, %v1222
      %v1224 = vpop.f32.mrf.mxu0
      %v1225 = vadd.f32 %v1125, %v1224
      %1226 = vmatprep.mubr.f32.mxu0 0.0
      %1227 = vmatmul.mubr.f32.gmra.mxu0 %v1142
      %v1228 = vpop.f32.mrf.mxu0
      %v1229 = vadd.f32 %v1130, %v1228
      %v1230 = vpop.f32.mrf.mxu0
      %v1231 = vadd.f32 %v1130, %v1230
      %1232 = vdwg.mxu0
      %vm1233 = vcmp.gt.f32.partialorder %v1211, 20.0
      %vm1234 = vcmp.gt.f32.partialorder %v1213, 20.0
      %vm1235 = vcmp.gt.f32.partialorder %v1217, 20.0
      %vm1236 = vcmp.gt.f32.partialorder %v1219, 20.0
      %vm1237 = vcmp.gt.f32.partialorder %v1223, 20.0
      %vm1238 = vcmp.gt.f32.partialorder %v1225, 20.0
      %vm1239 = vcmp.gt.f32.partialorder %v1229, 20.0
      %vm1240 = vcmp.gt.f32.partialorder %v1231, 20.0
      %v1241 = vmin.f32 %v1211, 20.0
      %v1242 = vmin.f32 %v1213, 20.0
      %v1243 = vmin.f32 %v1217, 20.0
      %v1244 = vmin.f32 %v1219, 20.0
      %v1245 = vmin.f32 %v1223, 20.0
      %v1246 = vmin.f32 %v1225, 20.0
      %v1247 = vmin.f32 %v1229, 20.0
      %v1248 = vmin.f32 %v1231, 20.0
      %v1249 = vmul.f32 %v1241, 1.442695
      %v1250 = vpow.pop %v1249
      %v1251 = vmul.f32 %v1242, 1.442695
      %v1252 = vpow.pop %v1251
      %v1253 = vmul.f32 %v1243, 1.442695
      %v1254 = vpow.pop %v1253
      %v1255 = vmul.f32 %v1244, 1.442695
      %v1256 = vpow.pop %v1255
      %v1257 = vmul.f32 %v1245, 1.442695
      %v1258 = vpow.pop %v1257
      %v1259 = vmul.f32 %v1246, 1.442695
      %v1260 = vpow.pop %v1259
      %v1261 = vmul.f32 %v1247, 1.442695
      %v1262 = vpow.pop %v1261
      %v1263 = vmul.f32 %v1248, 1.442695
      %v1264 = vpow.pop %v1263
      %v1265 = vadd.f32 %v1250, 1.0
      %v1266 = vlog2.pop %v1265
      %v1267 = vmul.f32 %v1266, 0.6931472
      %v1268 = vmul.f32 -0.5, %v1250
      %v1269 = vadd.f32 %v1268, 1.0
      %v1270 = vmul.f32 %v1269, %v1250
      %v1271 = vand.u32 2147483647, %v1250
      %vm1272 = vcmp.lt.f32.partialorder %v1271, 0.0004427343
      %v1273 = vsel %vm1272, %v1270, %v1267
      %v1274 = vadd.f32 %v1252, 1.0
      %v1275 = vlog2.pop %v1274
      %v1276 = vmul.f32 %v1275, 0.6931472
      %v1277 = vmul.f32 -0.5, %v1252
      %v1278 = vadd.f32 %v1277, 1.0
      %v1279 = vmul.f32 %v1278, %v1252
      %v1280 = vand.u32 2147483647, %v1252
      %vm1281 = vcmp.lt.f32.partialorder %v1280, 0.0004427343
      %v1282 = vsel %vm1281, %v1279, %v1276
      %v1283 = vadd.f32 %v1254, 1.0
      %v1284 = vlog2.pop %v1283
      %v1285 = vmul.f32 %v1284, 0.6931472
      %v1286 = vmul.f32 -0.5, %v1254
      %v1287 = vadd.f32 %v1286, 1.0
      %v1288 = vmul.f32 %v1287, %v1254
      %v1289 = vand.u32 2147483647, %v1254
      %vm1290 = vcmp.lt.f32.partialorder %v1289, 0.0004427343
      %v1291 = vsel %vm1290, %v1288, %v1285
      %v1292 = vadd.f32 %v1256, 1.0
      %v1293 = vlog2.pop %v1292
      %v1294 = vmul.f32 %v1293, 0.6931472
      %v1295 = vmul.f32 -0.5, %v1256
      %v1296 = vadd.f32 %v1295, 1.0
      %v1297 = vmul.f32 %v1296, %v1256
      %v1298 = vand.u32 2147483647, %v1256
      %vm1299 = vcmp.lt.f32.partialorder %v1298, 0.0004427343
      %v1300 = vsel %vm1299, %v1297, %v1294
      %v1301 = vadd.f32 %v1258, 1.0
      %v1302 = vlog2.pop %v1301
      %v1303 = vmul.f32 %v1302, 0.6931472
      %v1304 = vmul.f32 -0.5, %v1258
      %v1305 = vadd.f32 %v1304, 1.0
      %v1306 = vmul.f32 %v1305, %v1258
      %v1307 = vand.u32 2147483647, %v1258
      %vm1308 = vcmp.lt.f32.partialorder %v1307, 0.0004427343
      %v1309 = vsel %vm1308, %v1306, %v1303
      %v1310 = vadd.f32 %v1260, 1.0
      %v1311 = vlog2.pop %v1310
      %v1312 = vmul.f32 %v1311, 0.6931472
      %v1313 = vmul.f32 -0.5, %v1260
      %v1314 = vadd.f32 %v1313, 1.0
      %v1315 = vmul.f32 %v1314, %v1260
      %v1316 = vand.u32 2147483647, %v1260
      %vm1317 = vcmp.lt.f32.partialorder %v1316, 0.0004427343
      %v1318 = vsel %vm1317, %v1315, %v1312
      %v1319 = vadd.f32 %v1262, 1.0
      %v1320 = vlog2.pop %v1319
      %v1321 = vmul.f32 %v1320, 0.6931472
      %v1322 = vmul.f32 -0.5, %v1262
      %v1323 = vadd.f32 %v1322, 1.0
      %v1324 = vmul.f32 %v1323, %v1262
      %v1325 = vand.u32 2147483647, %v1262
      %vm1326 = vcmp.lt.f32.partialorder %v1325, 0.0004427343
      %v1327 = vsel %vm1326, %v1324, %v1321
      %v1328 = vadd.f32 %v1264, 1.0
      %v1329 = vlog2.pop %v1328
      %v1330 = vmul.f32 %v1329, 0.6931472
      %v1331 = vmul.f32 -0.5, %v1264
      %v1332 = vadd.f32 %v1331, 1.0
      %v1333 = vmul.f32 %v1332, %v1264
      %v1334 = vand.u32 2147483647, %v1264
      %vm1335 = vcmp.lt.f32.partialorder %v1334, 0.0004427343
      %v1336 = vsel %vm1335, %v1333, %v1330
      %v1337 = vsel %vm1233, %v1211, %v1273
      %v1338 = vsel %vm1234, %v1213, %v1282
      %v1339 = vsel %vm1235, %v1217, %v1291
      %v1340 = vsel %vm1236, %v1219, %v1300
      %v1341 = vsel %vm1237, %v1223, %v1309
      %v1342 = vsel %vm1238, %v1225, %v1318
      %v1343 = vsel %vm1239, %v1229, %v1327
      %v1344 = vsel %vm1240, %v1231, %v1336
      %v1345 = vld [vmem:[%s9] sm:$0xff]
      %v1346 = vld [vmem:[%s9 + $0x8] sm:$0xff]
      %v1347 = vld [vmem:[%s9 + $0x10] sm:$0xff]
      %v1348 = vld [vmem:[%s9 + $0x18] sm:$0xff]
      %v1349 = vld [vmem:[%s10] sm:$0xff]
      %v1350 = vld [vmem:[%s10 + $0x8] sm:$0xff]
      %v1351 = vld [vmem:[%s10 + $0x10] sm:$0xff]
      %v1352 = vld [vmem:[%s10 + $0x18] sm:$0xff]
      %1354 = vset.pattern.permute.xlu0 0
      %1355 = vperm.xlu0 %1354, %v1349
      %v1356 = vpop.permute.xlu0 %1355
      %1359 = vset.pattern.permute.xlu0 0
      %1360 = vperm.xlu0 %1359, %v1350
      %v1361 = vpop.permute.xlu0 %1360
      %1364 = vset.pattern.permute.xlu0 0
      %1365 = vperm.xlu0 %1364, %v1351
      %v1366 = vpop.permute.xlu0 %1365
      %1369 = vset.pattern.permute.xlu0 0
      %1370 = vperm.xlu0 %1369, %v1352
      %v1371 = vpop.permute.xlu0 %1370
      %v1374 = vsel %vm890, %v1345, 0
      %v1377 = vsel %vm890, %v1346, 0
      %v1380 = vsel %vm890, %v1347, 0
      %v1383 = vsel %vm890, %v1348, 0
      %1385 = vmatprep.subr.mxu0 0.0
      %1386 = vmatpush1.msra.mxu0 0.0
      %1387 = vmatprep.subr.mxu0 0.0
      %1388 = vmatpush1.msra.mxu0 0.0
      %1389 = vmatprep.subr.mxu0 0.0
      %1390 = vmatpush1.msra.mxu0 0.0
      %1391 = vmatprep.subr.mxu0 0.0
      %1392 = vmatpush1.msra.mxu0 0.0
      %1393 = vmatprep.subr.mxu0 0.0
      %1394 = vmatpush1.msra.mxu0 0.0
      %1395 = vmatprep.subr.mxu0 0.0
      %1396 = vmatpush1.msra.mxu0 0.0
      %1397 = vmatprep.subr.mxu0 0.0
      %1398 = vmatpush1.msra.mxu0 0.0
      %1399 = vmatprep.subr.mxu0 0.0
      %1400 = vmatpush1.msra.mxu0 0.0
      %1401 = vmatprep.subr.mxu0 0.0
      %1402 = vmatpush1.msra.mxu0 0.0
      %1403 = vmatprep.subr.mxu0 0.0
      %1404 = vmatpush1.msra.mxu0 0.0
      %1405 = vmatprep.subr.mxu0 0.0
      %1406 = vmatpush1.msra.mxu0 0.0
      %1407 = vmatprep.subr.mxu0 0.0
      %1408 = vmatpush1.msra.mxu0 0.0
      %1409 = vmatprep.subr.mxu0 %v1344
      %1410 = vmatpush1.msra.mxu0 %v1343
      %1411 = vmatprep.subr.mxu0 %v1342
      %1412 = vmatpush1.msra.mxu0 %v1341
      %1413 = vmatprep.subr.mxu0 %v1340
      %1414 = vmatpush1.msra.mxu0 %v1339
      %1415 = vmatprep.subr.mxu0 %v1338
      %1416 = vmatpush1.msra.mxu0 %v1337
      %1417 = vmatprep.subr.mxu0 0.0
      %1418 = vmatpush2.msra.mxu0 0.0
      %1419 = vmatprep.subr.mxu0 0.0
      %1420 = vmatpush2.msra.mxu0 0.0
      %1421 = vmatprep.subr.mxu0 0.0
      %1422 = vmatpush2.msra.mxu0 0.0
      %1423 = vmatprep.subr.mxu0 0.0
      %1424 = vmatpush2.msra.mxu0 0.0
      %1425 = vmatprep.subr.mxu0 0.0
      %1426 = vmatpush2.msra.mxu0 0.0
      %1427 = vmatprep.subr.mxu0 0.0
      %1428 = vmatpush2.msra.mxu0 0.0
      %1429 = vmatprep.subr.mxu0 0.0
      %1430 = vmatpush2.msra.mxu0 0.0
      %1431 = vmatprep.subr.mxu0 0.0
      %1432 = vmatpush2.msra.mxu0 0.0
      %1433 = vmatprep.subr.mxu0 0.0
      %1434 = vmatpush2.msra.mxu0 0.0
      %1435 = vmatprep.subr.mxu0 0.0
      %1436 = vmatpush2.msra.mxu0 0.0
      %1437 = vmatprep.subr.mxu0 0.0
      %1438 = vmatpush2.msra.mxu0 0.0
      %1439 = vmatprep.subr.mxu0 0.0
      %1440 = vmatpush2.msra.mxu0 0.0
      %1441 = vmatprep.subr.mxu0 0.0
      %1442 = vmatpush2.msra.mxu0 0.0
      %1443 = vmatprep.subr.mxu0 0.0
      %1444 = vmatpush2.msra.mxu0 0.0
      %1445 = vmatprep.subr.mxu0 0.0
      %1446 = vmatpush2.msra.mxu0 0.0
      %1447 = vmatprep.subr.mxu0 0.0
      %1448 = vmatpush2.msra.mxu0 0.0
      %1449 = vmatprep.mubr.f32.mxu0 0.0
      %1450 = vmatmul.mubr.f32.gmra.mxu0 %v1374
      %v1451 = vpop.f32.mrf.mxu0
      %v1452 = vadd.f32 %v1356, %v1451
      %v1453 = vpop.f32.mrf.mxu0
      %v1454 = vadd.f32 %v1356, %v1453
      %1455 = vmatprep.mubr.f32.mxu0 0.0
      %1456 = vmatmul.mubr.f32.gmra.mxu0 %v1377
      %v1457 = vpop.f32.mrf.mxu0
      %v1458 = vadd.f32 %v1361, %v1457
      %v1459 = vpop.f32.mrf.mxu0
      %v1460 = vadd.f32 %v1361, %v1459
      %1461 = vmatprep.mubr.f32.mxu0 0.0
      %1462 = vmatmul.mubr.f32.gmra.mxu0 %v1380
      %v1463 = vpop.f32.mrf.mxu0
      %v1464 = vadd.f32 %v1366, %v1463
      %v1465 = vpop.f32.mrf.mxu0
      %v1466 = vadd.f32 %v1366, %v1465
      %1467 = vmatprep.mubr.f32.mxu0 0.0
      %1468 = vmatmul.mubr.f32.gmra.mxu0 %v1383
      %v1469 = vpop.f32.mrf.mxu0
      %v1470 = vadd.f32 %v1371, %v1469
      %v1471 = vpop.f32.mrf.mxu0
      %v1472 = vadd.f32 %v1371, %v1471
      %1473 = vdwg.mxu0
      %vm1474 = vcmp.gt.f32.partialorder %v1452, 20.0
      %vm1475 = vcmp.gt.f32.partialorder %v1454, 20.0
      %vm1476 = vcmp.gt.f32.partialorder %v1458, 20.0
      %vm1477 = vcmp.gt.f32.partialorder %v1460, 20.0
      %vm1478 = vcmp.gt.f32.partialorder %v1464, 20.0
      %vm1479 = vcmp.gt.f32.partialorder %v1466, 20.0
      %vm1480 = vcmp.gt.f32.partialorder %v1470, 20.0
      %vm1481 = vcmp.gt.f32.partialorder %v1472, 20.0
      %v1482 = vmin.f32 %v1452, 20.0
      %v1483 = vmin.f32 %v1454, 20.0
      %v1484 = vmin.f32 %v1458, 20.0
      %v1485 = vmin.f32 %v1460, 20.0
      %v1486 = vmin.f32 %v1464, 20.0
      %v1487 = vmin.f32 %v1466, 20.0
      %v1488 = vmin.f32 %v1470, 20.0
      %v1489 = vmin.f32 %v1472, 20.0
      %v1490 = vmul.f32 %v1482, 1.442695
      %v1491 = vpow.pop %v1490
      %v1492 = vmul.f32 %v1483, 1.442695
      %v1493 = vpow.pop %v1492
      %v1494 = vmul.f32 %v1484, 1.442695
      %v1495 = vpow.pop %v1494
      %v1496 = vmul.f32 %v1485, 1.442695
      %v1497 = vpow.pop %v1496
      %v1498 = vmul.f32 %v1486, 1.442695
      %v1499 = vpow.pop %v1498
      %v1500 = vmul.f32 %v1487, 1.442695
      %v1501 = vpow.pop %v1500
      %v1502 = vmul.f32 %v1488, 1.442695
      %v1503 = vpow.pop %v1502
      %v1504 = vmul.f32 %v1489, 1.442695
      %v1505 = vpow.pop %v1504
      %v1506 = vadd.f32 %v1491, 1.0
      %v1507 = vlog2.pop %v1506
      %v1508 = vmul.f32 %v1507, 0.6931472
      %v1509 = vmul.f32 -0.5, %v1491
      %v1510 = vadd.f32 %v1509, 1.0
      %v1511 = vmul.f32 %v1510, %v1491
      %v1512 = vand.u32 2147483647, %v1491
      %vm1513 = vcmp.lt.f32.partialorder %v1512, 0.0004427343
      %v1514 = vsel %vm1513, %v1511, %v1508
      %v1515 = vadd.f32 %v1493, 1.0
      %v1516 = vlog2.pop %v1515
      %v1517 = vmul.f32 %v1516, 0.6931472
      %v1518 = vmul.f32 -0.5, %v1493
      %v1519 = vadd.f32 %v1518, 1.0
      %v1520 = vmul.f32 %v1519, %v1493
      %v1521 = vand.u32 2147483647, %v1493
      %vm1522 = vcmp.lt.f32.partialorder %v1521, 0.0004427343
      %v1523 = vsel %vm1522, %v1520, %v1517
      %v1524 = vadd.f32 %v1495, 1.0
      %v1525 = vlog2.pop %v1524
      %v1526 = vmul.f32 %v1525, 0.6931472
      %v1527 = vmul.f32 -0.5, %v1495
      %v1528 = vadd.f32 %v1527, 1.0
      %v1529 = vmul.f32 %v1528, %v1495
      %v1530 = vand.u32 2147483647, %v1495
      %vm1531 = vcmp.lt.f32.partialorder %v1530, 0.0004427343
      %v1532 = vsel %vm1531, %v1529, %v1526
      %v1533 = vadd.f32 %v1497, 1.0
      %v1534 = vlog2.pop %v1533
      %v1535 = vmul.f32 %v1534, 0.6931472
      %v1536 = vmul.f32 -0.5, %v1497
      %v1537 = vadd.f32 %v1536, 1.0
      %v1538 = vmul.f32 %v1537, %v1497
      %v1539 = vand.u32 2147483647, %v1497
      %vm1540 = vcmp.lt.f32.partialorder %v1539, 0.0004427343
      %v1541 = vsel %vm1540, %v1538, %v1535
      %v1542 = vadd.f32 %v1499, 1.0
      %v1543 = vlog2.pop %v1542
      %v1544 = vmul.f32 %v1543, 0.6931472
      %v1545 = vmul.f32 -0.5, %v1499
      %v1546 = vadd.f32 %v1545, 1.0
      %v1547 = vmul.f32 %v1546, %v1499
      %v1548 = vand.u32 2147483647, %v1499
      %vm1549 = vcmp.lt.f32.partialorder %v1548, 0.0004427343
      %v1550 = vsel %vm1549, %v1547, %v1544
      %v1551 = vadd.f32 %v1501, 1.0
      %v1552 = vlog2.pop %v1551
      %v1553 = vmul.f32 %v1552, 0.6931472
      %v1554 = vmul.f32 -0.5, %v1501
      %v1555 = vadd.f32 %v1554, 1.0
      %v1556 = vmul.f32 %v1555, %v1501
      %v1557 = vand.u32 2147483647, %v1501
      %vm1558 = vcmp.lt.f32.partialorder %v1557, 0.0004427343
      %v1559 = vsel %vm1558, %v1556, %v1553
      %v1560 = vadd.f32 %v1503, 1.0
      %v1561 = vlog2.pop %v1560
      %v1562 = vmul.f32 %v1561, 0.6931472
      %v1563 = vmul.f32 -0.5, %v1503
      %v1564 = vadd.f32 %v1563, 1.0
      %v1565 = vmul.f32 %v1564, %v1503
      %v1566 = vand.u32 2147483647, %v1503
      %vm1567 = vcmp.lt.f32.partialorder %v1566, 0.0004427343
      %v1568 = vsel %vm1567, %v1565, %v1562
      %v1569 = vadd.f32 %v1505, 1.0
      %v1570 = vlog2.pop %v1569
      %v1571 = vmul.f32 %v1570, 0.6931472
      %v1572 = vmul.f32 -0.5, %v1505
      %v1573 = vadd.f32 %v1572, 1.0
      %v1574 = vmul.f32 %v1573, %v1505
      %v1575 = vand.u32 2147483647, %v1505
      %vm1576 = vcmp.lt.f32.partialorder %v1575, 0.0004427343
      %v1577 = vsel %vm1576, %v1574, %v1571
      %v1578 = vsel %vm1474, %v1452, %v1514
      %v1579 = vsel %vm1475, %v1454, %v1523
      %v1580 = vsel %vm1476, %v1458, %v1532
      %v1581 = vsel %vm1477, %v1460, %v1541
      %v1582 = vsel %vm1478, %v1464, %v1550
      %v1583 = vsel %vm1479, %v1466, %v1559
      %v1584 = vsel %vm1480, %v1470, %v1568
      %v1585 = vsel %vm1481, %v1472, %v1577
      %v1586 = vld [vmem:[%s11] sm:$0xff]
      %v1587 = vld [vmem:[%s11 + $0x8] sm:$0xff]
      %v1588 = vld [vmem:[%s11 + $0x10] sm:$0xff]
      %v1589 = vld [vmem:[%s11 + $0x18] sm:$0xff]
      %v1590 = vld [vmem:[%s12] sm:$0xff]
      %v1591 = vld [vmem:[%s12 + $0x8] sm:$0xff]
      %v1592 = vld [vmem:[%s12 + $0x10] sm:$0xff]
      %v1593 = vld [vmem:[%s12 + $0x18] sm:$0xff]
      %1595 = vset.pattern.permute.xlu0 0
      %1596 = vperm.xlu0 %1595, %v1590
      %v1597 = vpop.permute.xlu0 %1596
      %1600 = vset.pattern.permute.xlu0 0
      %1601 = vperm.xlu0 %1600, %v1591
      %v1602 = vpop.permute.xlu0 %1601
      %1605 = vset.pattern.permute.xlu0 0
      %1606 = vperm.xlu0 %1605, %v1592
      %v1607 = vpop.permute.xlu0 %1606
      %1610 = vset.pattern.permute.xlu0 0
      %1611 = vperm.xlu0 %1610, %v1593
      %v1612 = vpop.permute.xlu0 %1611
      %v1615 = vsel %vm890, %v1586, 0
      %v1618 = vsel %vm890, %v1587, 0
      %v1621 = vsel %vm890, %v1588, 0
      %v1624 = vsel %vm890, %v1589, 0
      %1626 = vmatprep.subr.mxu0 0.0
      %1627 = vmatpush1.msra.mxu0 0.0
      %1628 = vmatprep.subr.mxu0 0.0
      %1629 = vmatpush1.msra.mxu0 0.0
      %1630 = vmatprep.subr.mxu0 0.0
      %1631 = vmatpush1.msra.mxu0 0.0
      %1632 = vmatprep.subr.mxu0 0.0
      %1633 = vmatpush1.msra.mxu0 0.0
      %1634 = vmatprep.subr.mxu0 0.0
      %1635 = vmatpush1.msra.mxu0 0.0
      %1636 = vmatprep.subr.mxu0 0.0
      %1637 = vmatpush1.msra.mxu0 0.0
      %1638 = vmatprep.subr.mxu0 0.0
      %1639 = vmatpush1.msra.mxu0 0.0
      %1640 = vmatprep.subr.mxu0 0.0
      %1641 = vmatpush1.msra.mxu0 0.0
      %1642 = vmatprep.subr.mxu0 0.0
      %1643 = vmatpush1.msra.mxu0 0.0
      %1644 = vmatprep.subr.mxu0 0.0
      %1645 = vmatpush1.msra.mxu0 0.0
      %1646 = vmatprep.subr.mxu0 0.0
      %1647 = vmatpush1.msra.mxu0 0.0
      %1648 = vmatprep.subr.mxu0 0.0
      %1649 = vmatpush1.msra.mxu0 0.0
      %1650 = vmatprep.subr.mxu0 %v1585
      %1651 = vmatpush1.msra.mxu0 %v1584
      %1652 = vmatprep.subr.mxu0 %v1583
      %1653 = vmatpush1.msra.mxu0 %v1582
      %1654 = vmatprep.subr.mxu0 %v1581
      %1655 = vmatpush1.msra.mxu0 %v1580
      %1656 = vmatprep.subr.mxu0 %v1579
      %1657 = vmatpush1.msra.mxu0 %v1578
      %1658 = vmatprep.subr.mxu0 0.0
      %1659 = vmatpush2.msra.mxu0 0.0
      %1660 = vmatprep.subr.mxu0 0.0
      %1661 = vmatpush2.msra.mxu0 0.0
      %1662 = vmatprep.subr.mxu0 0.0
      %1663 = vmatpush2.msra.mxu0 0.0
      %1664 = vmatprep.subr.mxu0 0.0
      %1665 = vmatpush2.msra.mxu0 0.0
      %1666 = vmatprep.subr.mxu0 0.0
      %1667 = vmatpush2.msra.mxu0 0.0
      %1668 = vmatprep.subr.mxu0 0.0
      %1669 = vmatpush2.msra.mxu0 0.0
      %1670 = vmatprep.subr.mxu0 0.0
      %1671 = vmatpush2.msra.mxu0 0.0
      %1672 = vmatprep.subr.mxu0 0.0
      %1673 = vmatpush2.msra.mxu0 0.0
      %1674 = vmatprep.subr.mxu0 0.0
      %1675 = vmatpush2.msra.mxu0 0.0
      %1676 = vmatprep.subr.mxu0 0.0
      %1677 = vmatpush2.msra.mxu0 0.0
      %1678 = vmatprep.subr.mxu0 0.0
      %1679 = vmatpush2.msra.mxu0 0.0
      %1680 = vmatprep.subr.mxu0 0.0
      %1681 = vmatpush2.msra.mxu0 0.0
      %1682 = vmatprep.subr.mxu0 0.0
      %1683 = vmatpush2.msra.mxu0 0.0
      %1684 = vmatprep.subr.mxu0 0.0
      %1685 = vmatpush2.msra.mxu0 0.0
      %1686 = vmatprep.subr.mxu0 0.0
      %1687 = vmatpush2.msra.mxu0 0.0
      %1688 = vmatprep.subr.mxu0 0.0
      %1689 = vmatpush2.msra.mxu0 0.0
      %1690 = vmatprep.mubr.f32.mxu0 0.0
      %1691 = vmatmul.mubr.f32.gmra.mxu0 %v1615
      %v1692 = vpop.f32.mrf.mxu0
      %v1693 = vadd.f32 %v1597, %v1692
      %v1694 = vpop.f32.mrf.mxu0
      %v1695 = vadd.f32 %v1597, %v1694
      %1696 = vmatprep.mubr.f32.mxu0 0.0
      %1697 = vmatmul.mubr.f32.gmra.mxu0 %v1618
      %v1698 = vpop.f32.mrf.mxu0
      %v1699 = vadd.f32 %v1602, %v1698
      %v1700 = vpop.f32.mrf.mxu0
      %v1701 = vadd.f32 %v1602, %v1700
      %1702 = vmatprep.mubr.f32.mxu0 0.0
      %1703 = vmatmul.mubr.f32.gmra.mxu0 %v1621
      %v1704 = vpop.f32.mrf.mxu0
      %v1705 = vadd.f32 %v1607, %v1704
      %v1706 = vpop.f32.mrf.mxu0
      %v1707 = vadd.f32 %v1607, %v1706
      %1708 = vmatprep.mubr.f32.mxu0 0.0
      %1709 = vmatmul.mubr.f32.gmra.mxu0 %v1624
      %v1710 = vpop.f32.mrf.mxu0
      %v1711 = vadd.f32 %v1612, %v1710
      %v1712 = vpop.f32.mrf.mxu0
      %v1713 = vadd.f32 %v1612, %v1712
      %1714 = vdwg.mxu0
      %vm1715 = vcmp.gt.f32.partialorder %v1693, 20.0
      %vm1716 = vcmp.gt.f32.partialorder %v1695, 20.0
      %vm1717 = vcmp.gt.f32.partialorder %v1699, 20.0
      %vm1718 = vcmp.gt.f32.partialorder %v1701, 20.0
      %vm1719 = vcmp.gt.f32.partialorder %v1705, 20.0
      %vm1720 = vcmp.gt.f32.partialorder %v1707, 20.0
      %vm1721 = vcmp.gt.f32.partialorder %v1711, 20.0
      %vm1722 = vcmp.gt.f32.partialorder %v1713, 20.0
      %v1723 = vmin.f32 %v1693, 20.0
      %v1724 = vmin.f32 %v1695, 20.0
      %v1725 = vmin.f32 %v1699, 20.0
      %v1726 = vmin.f32 %v1701, 20.0
      %v1727 = vmin.f32 %v1705, 20.0
      %v1728 = vmin.f32 %v1707, 20.0
      %v1729 = vmin.f32 %v1711, 20.0
      %v1730 = vmin.f32 %v1713, 20.0
      %v1731 = vmul.f32 %v1723, 1.442695
      %v1732 = vpow.pop %v1731
      %v1733 = vmul.f32 %v1724, 1.442695
      %v1734 = vpow.pop %v1733
      %v1735 = vmul.f32 %v1725, 1.442695
      %v1736 = vpow.pop %v1735
      %v1737 = vmul.f32 %v1726, 1.442695
      %v1738 = vpow.pop %v1737
      %v1739 = vmul.f32 %v1727, 1.442695
      %v1740 = vpow.pop %v1739
      %v1741 = vmul.f32 %v1728, 1.442695
      %v1742 = vpow.pop %v1741
      %v1743 = vmul.f32 %v1729, 1.442695
      %v1744 = vpow.pop %v1743
      %v1745 = vmul.f32 %v1730, 1.442695
      %v1746 = vpow.pop %v1745
      %v1747 = vadd.f32 %v1732, 1.0
      %v1748 = vlog2.pop %v1747
      %v1749 = vmul.f32 %v1748, 0.6931472
      %v1750 = vmul.f32 -0.5, %v1732
      %v1751 = vadd.f32 %v1750, 1.0
      %v1752 = vmul.f32 %v1751, %v1732
      %v1753 = vand.u32 2147483647, %v1732
      %vm1754 = vcmp.lt.f32.partialorder %v1753, 0.0004427343
      %v1755 = vsel %vm1754, %v1752, %v1749
      %v1756 = vadd.f32 %v1734, 1.0
      %v1757 = vlog2.pop %v1756
      %v1758 = vmul.f32 %v1757, 0.6931472
      %v1759 = vmul.f32 -0.5, %v1734
      %v1760 = vadd.f32 %v1759, 1.0
      %v1761 = vmul.f32 %v1760, %v1734
      %v1762 = vand.u32 2147483647, %v1734
      %vm1763 = vcmp.lt.f32.partialorder %v1762, 0.0004427343
      %v1764 = vsel %vm1763, %v1761, %v1758
      %v1765 = vadd.f32 %v1736, 1.0
      %v1766 = vlog2.pop %v1765
      %v1767 = vmul.f32 %v1766, 0.6931472
      %v1768 = vmul.f32 -0.5, %v1736
      %v1769 = vadd.f32 %v1768, 1.0
      %v1770 = vmul.f32 %v1769, %v1736
      %v1771 = vand.u32 2147483647, %v1736
      %vm1772 = vcmp.lt.f32.partialorder %v1771, 0.0004427343
      %v1773 = vsel %vm1772, %v1770, %v1767
      %v1774 = vadd.f32 %v1738, 1.0
      %v1775 = vlog2.pop %v1774
      %v1776 = vmul.f32 %v1775, 0.6931472
      %v1777 = vmul.f32 -0.5, %v1738
      %v1778 = vadd.f32 %v1777, 1.0
      %v1779 = vmul.f32 %v1778, %v1738
      %v1780 = vand.u32 2147483647, %v1738
      %vm1781 = vcmp.lt.f32.partialorder %v1780, 0.0004427343
      %v1782 = vsel %vm1781, %v1779, %v1776
      %v1783 = vadd.f32 %v1740, 1.0
      %v1784 = vlog2.pop %v1783
      %v1785 = vmul.f32 %v1784, 0.6931472
      %v1786 = vmul.f32 -0.5, %v1740
      %v1787 = vadd.f32 %v1786, 1.0
      %v1788 = vmul.f32 %v1787, %v1740
      %v1789 = vand.u32 2147483647, %v1740
      %vm1790 = vcmp.lt.f32.partialorder %v1789, 0.0004427343
      %v1791 = vsel %vm1790, %v1788, %v1785
      %v1792 = vadd.f32 %v1742, 1.0
      %v1793 = vlog2.pop %v1792
      %v1794 = vmul.f32 %v1793, 0.6931472
      %v1795 = vmul.f32 -0.5, %v1742
      %v1796 = vadd.f32 %v1795, 1.0
      %v1797 = vmul.f32 %v1796, %v1742
      %v1798 = vand.u32 2147483647, %v1742
      %vm1799 = vcmp.lt.f32.partialorder %v1798, 0.0004427343
      %v1800 = vsel %vm1799, %v1797, %v1794
      %v1801 = vadd.f32 %v1744, 1.0
      %v1802 = vlog2.pop %v1801
      %v1803 = vmul.f32 %v1802, 0.6931472
      %v1804 = vmul.f32 -0.5, %v1744
      %v1805 = vadd.f32 %v1804, 1.0
      %v1806 = vmul.f32 %v1805, %v1744
      %v1807 = vand.u32 2147483647, %v1744
      %vm1808 = vcmp.lt.f32.partialorder %v1807, 0.0004427343
      %v1809 = vsel %vm1808, %v1806, %v1803
      %v1810 = vadd.f32 %v1746, 1.0
      %v1811 = vlog2.pop %v1810
      %v1812 = vmul.f32 %v1811, 0.6931472
      %v1813 = vmul.f32 -0.5, %v1746
      %v1814 = vadd.f32 %v1813, 1.0
      %v1815 = vmul.f32 %v1814, %v1746
      %v1816 = vand.u32 2147483647, %v1746
      %vm1817 = vcmp.lt.f32.partialorder %v1816, 0.0004427343
      %v1818 = vsel %vm1817, %v1815, %v1812
      %v1819 = vsel %vm1715, %v1693, %v1755
      %v1820 = vsel %vm1716, %v1695, %v1764
      %v1821 = vsel %vm1717, %v1699, %v1773
      %v1822 = vsel %vm1718, %v1701, %v1782
      %v1823 = vsel %vm1719, %v1705, %v1791
      %v1824 = vsel %vm1720, %v1707, %v1800
      %v1825 = vsel %vm1721, %v1711, %v1809
      %v1826 = vsel %vm1722, %v1713, %v1818
      %v1827 = vld [vmem:[%s13] sm:$0xff]
      %v1828 = vld [vmem:[%s13 + $0x8] sm:$0xff]
      %v1829 = vld [vmem:[%s13 + $0x10] sm:$0xff]
      %v1830 = vld [vmem:[%s13 + $0x18] sm:$0xff]
      %v1831 = vld [vmem:[%s14] sm:$0xff]
      %v1832 = vld [vmem:[%s14 + $0x8] sm:$0xff]
      %v1833 = vld [vmem:[%s14 + $0x10] sm:$0xff]
      %v1834 = vld [vmem:[%s14 + $0x18] sm:$0xff]
      %1836 = vset.pattern.permute.xlu0 0
      %1837 = vperm.xlu0 %1836, %v1831
      %v1838 = vpop.permute.xlu0 %1837
      %1841 = vset.pattern.permute.xlu0 0
      %1842 = vperm.xlu0 %1841, %v1832
      %v1843 = vpop.permute.xlu0 %1842
      %1846 = vset.pattern.permute.xlu0 0
      %1847 = vperm.xlu0 %1846, %v1833
      %v1848 = vpop.permute.xlu0 %1847
      %1851 = vset.pattern.permute.xlu0 0
      %1852 = vperm.xlu0 %1851, %v1834
      %v1853 = vpop.permute.xlu0 %1852
      %v1856 = vsel %vm890, %v1827, 0
      %v1859 = vsel %vm890, %v1828, 0
      %v1862 = vsel %vm890, %v1829, 0
      %v1865 = vsel %vm890, %v1830, 0
      %1867 = vmatprep.subr.mxu0 0.0
      %1868 = vmatpush1.msra.mxu0 0.0
      %1869 = vmatprep.subr.mxu0 0.0
      %1870 = vmatpush1.msra.mxu0 0.0
      %1871 = vmatprep.subr.mxu0 0.0
      %1872 = vmatpush1.msra.mxu0 0.0
      %1873 = vmatprep.subr.mxu0 0.0
      %1874 = vmatpush1.msra.mxu0 0.0
      %1875 = vmatprep.subr.mxu0 0.0
      %1876 = vmatpush1.msra.mxu0 0.0
      %1877 = vmatprep.subr.mxu0 0.0
      %1878 = vmatpush1.msra.mxu0 0.0
      %1879 = vmatprep.subr.mxu0 0.0
      %1880 = vmatpush1.msra.mxu0 0.0
      %1881 = vmatprep.subr.mxu0 0.0
      %1882 = vmatpush1.msra.mxu0 0.0
      %1883 = vmatprep.subr.mxu0 0.0
      %1884 = vmatpush1.msra.mxu0 0.0
      %1885 = vmatprep.subr.mxu0 0.0
      %1886 = vmatpush1.msra.mxu0 0.0
      %1887 = vmatprep.subr.mxu0 0.0
      %1888 = vmatpush1.msra.mxu0 0.0
      %1889 = vmatprep.subr.mxu0 0.0
      %1890 = vmatpush1.msra.mxu0 0.0
      %1891 = vmatprep.subr.mxu0 %v1826
      %1892 = vmatpush1.msra.mxu0 %v1825
      %1893 = vmatprep.subr.mxu0 %v1824
      %1894 = vmatpush1.msra.mxu0 %v1823
      %1895 = vmatprep.subr.mxu0 %v1822
      %1896 = vmatpush1.msra.mxu0 %v1821
      %1897 = vmatprep.subr.mxu0 %v1820
      %1898 = vmatpush1.msra.mxu0 %v1819
      %1899 = vmatprep.subr.mxu0 0.0
      %1900 = vmatpush2.msra.mxu0 0.0
      %1901 = vmatprep.subr.mxu0 0.0
      %1902 = vmatpush2.msra.mxu0 0.0
      %1903 = vmatprep.subr.mxu0 0.0
      %1904 = vmatpush2.msra.mxu0 0.0
      %1905 = vmatprep.subr.mxu0 0.0
      %1906 = vmatpush2.msra.mxu0 0.0
      %1907 = vmatprep.subr.mxu0 0.0
      %1908 = vmatpush2.msra.mxu0 0.0
      %1909 = vmatprep.subr.mxu0 0.0
      %1910 = vmatpush2.msra.mxu0 0.0
      %1911 = vmatprep.subr.mxu0 0.0
      %1912 = vmatpush2.msra.mxu0 0.0
      %1913 = vmatprep.subr.mxu0 0.0
      %1914 = vmatpush2.msra.mxu0 0.0
      %1915 = vmatprep.subr.mxu0 0.0
      %1916 = vmatpush2.msra.mxu0 0.0
      %1917 = vmatprep.subr.mxu0 0.0
      %1918 = vmatpush2.msra.mxu0 0.0
      %1919 = vmatprep.subr.mxu0 0.0
      %1920 = vmatpush2.msra.mxu0 0.0
      %1921 = vmatprep.subr.mxu0 0.0
      %1922 = vmatpush2.msra.mxu0 0.0
      %1923 = vmatprep.subr.mxu0 0.0
      %1924 = vmatpush2.msra.mxu0 0.0
      %1925 = vmatprep.subr.mxu0 0.0
      %1926 = vmatpush2.msra.mxu0 0.0
      %1927 = vmatprep.subr.mxu0 0.0
      %1928 = vmatpush2.msra.mxu0 0.0
      %1929 = vmatprep.subr.mxu0 0.0
      %1930 = vmatpush2.msra.mxu0 0.0
      %1931 = vmatprep.mubr.f32.mxu0 0.0
      %1932 = vmatmul.mubr.f32.gmra.mxu0 %v1856
      %v1933 = vpop.f32.mrf.mxu0
      %v1934 = vadd.f32 %v1838, %v1933
      %v1935 = vpop.f32.mrf.mxu0
      %v1936 = vadd.f32 %v1838, %v1935
      %1937 = vmatprep.mubr.f32.mxu0 0.0
      %1938 = vmatmul.mubr.f32.gmra.mxu0 %v1859
      %v1939 = vpop.f32.mrf.mxu0
      %v1940 = vadd.f32 %v1843, %v1939
      %v1941 = vpop.f32.mrf.mxu0
      %v1942 = vadd.f32 %v1843, %v1941
      %1943 = vmatprep.mubr.f32.mxu0 0.0
      %1944 = vmatmul.mubr.f32.gmra.mxu0 %v1862
      %v1945 = vpop.f32.mrf.mxu0
      %v1946 = vadd.f32 %v1848, %v1945
      %v1947 = vpop.f32.mrf.mxu0
      %v1948 = vadd.f32 %v1848, %v1947
      %1949 = vmatprep.mubr.f32.mxu0 0.0
      %1950 = vmatmul.mubr.f32.gmra.mxu0 %v1865
      %v1951 = vpop.f32.mrf.mxu0
      %v1952 = vadd.f32 %v1853, %v1951
      %v1953 = vpop.f32.mrf.mxu0
      %v1954 = vadd.f32 %v1853, %v1953
      %1955 = vdwg.mxu0
      %vm1956 = vcmp.gt.f32.partialorder %v1934, 20.0
      %vm1957 = vcmp.gt.f32.partialorder %v1936, 20.0
      %vm1958 = vcmp.gt.f32.partialorder %v1940, 20.0
      %vm1959 = vcmp.gt.f32.partialorder %v1942, 20.0
      %vm1960 = vcmp.gt.f32.partialorder %v1946, 20.0
      %vm1961 = vcmp.gt.f32.partialorder %v1948, 20.0
      %vm1962 = vcmp.gt.f32.partialorder %v1952, 20.0
      %vm1963 = vcmp.gt.f32.partialorder %v1954, 20.0
      %v1964 = vmin.f32 %v1934, 20.0
      %v1965 = vmin.f32 %v1936, 20.0
      %v1966 = vmin.f32 %v1940, 20.0
      %v1967 = vmin.f32 %v1942, 20.0
      %v1968 = vmin.f32 %v1946, 20.0
      %v1969 = vmin.f32 %v1948, 20.0
      %v1970 = vmin.f32 %v1952, 20.0
      %v1971 = vmin.f32 %v1954, 20.0
      %v1972 = vmul.f32 %v1964, 1.442695
      %v1973 = vpow.pop %v1972
      %v1974 = vmul.f32 %v1965, 1.442695
      %v1975 = vpow.pop %v1974
      %v1976 = vmul.f32 %v1966, 1.442695
      %v1977 = vpow.pop %v1976
      %v1978 = vmul.f32 %v1967, 1.442695
      %v1979 = vpow.pop %v1978
      %v1980 = vmul.f32 %v1968, 1.442695
      %v1981 = vpow.pop %v1980
      %v1982 = vmul.f32 %v1969, 1.442695
      %v1983 = vpow.pop %v1982
      %v1984 = vmul.f32 %v1970, 1.442695
      %v1985 = vpow.pop %v1984
      %v1986 = vmul.f32 %v1971, 1.442695
      %v1987 = vpow.pop %v1986
      %v1988 = vadd.f32 %v1973, 1.0
      %v1989 = vlog2.pop %v1988
      %v1990 = vmul.f32 %v1989, 0.6931472
      %v1991 = vmul.f32 -0.5, %v1973
      %v1992 = vadd.f32 %v1991, 1.0
      %v1993 = vmul.f32 %v1992, %v1973
      %v1994 = vand.u32 2147483647, %v1973
      %vm1995 = vcmp.lt.f32.partialorder %v1994, 0.0004427343
      %v1996 = vsel %vm1995, %v1993, %v1990
      %v1997 = vadd.f32 %v1975, 1.0
      %v1998 = vlog2.pop %v1997
      %v1999 = vmul.f32 %v1998, 0.6931472
      %v2000 = vmul.f32 -0.5, %v1975
      %v2001 = vadd.f32 %v2000, 1.0
      %v2002 = vmul.f32 %v2001, %v1975
      %v2003 = vand.u32 2147483647, %v1975
      %vm2004 = vcmp.lt.f32.partialorder %v2003, 0.0004427343
      %v2005 = vsel %vm2004, %v2002, %v1999
      %v2006 = vadd.f32 %v1977, 1.0
      %v2007 = vlog2.pop %v2006
      %v2008 = vmul.f32 %v2007, 0.6931472
      %v2009 = vmul.f32 -0.5, %v1977
      %v2010 = vadd.f32 %v2009, 1.0
      %v2011 = vmul.f32 %v2010, %v1977
      %v2012 = vand.u32 2147483647, %v1977
      %vm2013 = vcmp.lt.f32.partialorder %v2012, 0.0004427343
      %v2014 = vsel %vm2013, %v2011, %v2008
      %v2015 = vadd.f32 %v1979, 1.0
      %v2016 = vlog2.pop %v2015
      %v2017 = vmul.f32 %v2016, 0.6931472
      %v2018 = vmul.f32 -0.5, %v1979
      %v2019 = vadd.f32 %v2018, 1.0
      %v2020 = vmul.f32 %v2019, %v1979
      %v2021 = vand.u32 2147483647, %v1979
      %vm2022 = vcmp.lt.f32.partialorder %v2021, 0.0004427343
      %v2023 = vsel %vm2022, %v2020, %v2017
      %v2024 = vadd.f32 %v1981, 1.0
      %v2025 = vlog2.pop %v2024
      %v2026 = vmul.f32 %v2025, 0.6931472
      %v2027 = vmul.f32 -0.5, %v1981
      %v2028 = vadd.f32 %v2027, 1.0
      %v2029 = vmul.f32 %v2028, %v1981
      %v2030 = vand.u32 2147483647, %v1981
      %vm2031 = vcmp.lt.f32.partialorder %v2030, 0.0004427343
      %v2032 = vsel %vm2031, %v2029, %v2026
      %v2033 = vadd.f32 %v1983, 1.0
      %v2034 = vlog2.pop %v2033
      %v2035 = vmul.f32 %v2034, 0.6931472
      %v2036 = vmul.f32 -0.5, %v1983
      %v2037 = vadd.f32 %v2036, 1.0
      %v2038 = vmul.f32 %v2037, %v1983
      %v2039 = vand.u32 2147483647, %v1983
      %vm2040 = vcmp.lt.f32.partialorder %v2039, 0.0004427343
      %v2041 = vsel %vm2040, %v2038, %v2035
      %v2042 = vadd.f32 %v1985, 1.0
      %v2043 = vlog2.pop %v2042
      %v2044 = vmul.f32 %v2043, 0.6931472
      %v2045 = vmul.f32 -0.5, %v1985
      %v2046 = vadd.f32 %v2045, 1.0
      %v2047 = vmul.f32 %v2046, %v1985
      %v2048 = vand.u32 2147483647, %v1985
      %vm2049 = vcmp.lt.f32.partialorder %v2048, 0.0004427343
      %v2050 = vsel %vm2049, %v2047, %v2044
      %v2051 = vadd.f32 %v1987, 1.0
      %v2052 = vlog2.pop %v2051
      %v2053 = vmul.f32 %v2052, 0.6931472
      %v2054 = vmul.f32 -0.5, %v1987
      %v2055 = vadd.f32 %v2054, 1.0
      %v2056 = vmul.f32 %v2055, %v1987
      %v2057 = vand.u32 2147483647, %v1987
      %vm2058 = vcmp.lt.f32.partialorder %v2057, 0.0004427343
      %v2059 = vsel %vm2058, %v2056, %v2053
      %v2060 = vsel %vm1956, %v1934, %v1996
      %v2061 = vsel %vm1957, %v1936, %v2005
      %v2062 = vsel %vm1958, %v1940, %v2014
      %v2063 = vsel %vm1959, %v1942, %v2023
      %v2064 = vsel %vm1960, %v1946, %v2032
      %v2065 = vsel %vm1961, %v1948, %v2041
      %v2066 = vsel %vm1962, %v1952, %v2050
      %v2067 = vsel %vm1963, %v1954, %v2059
      %v2068 = vld [vmem:[%s15] sm:$0xff]
      %v2069 = vld [vmem:[%s15 + $0x8] sm:$0xff]
      %v2070 = vld [vmem:[%s15 + $0x10] sm:$0xff]
      %v2071 = vld [vmem:[%s15 + $0x18] sm:$0xff]
      %v2072 = vld [vmem:[%s16] sm:$0xff]
      %v2073 = vld [vmem:[%s16 + $0x8] sm:$0xff]
      %v2074 = vld [vmem:[%s16 + $0x10] sm:$0xff]
      %v2075 = vld [vmem:[%s16 + $0x18] sm:$0xff]
      %2077 = vset.pattern.permute.xlu0 0
      %2078 = vperm.xlu0 %2077, %v2072
      %v2079 = vpop.permute.xlu0 %2078
      %2082 = vset.pattern.permute.xlu0 0
      %2083 = vperm.xlu0 %2082, %v2073
      %v2084 = vpop.permute.xlu0 %2083
      %2087 = vset.pattern.permute.xlu0 0
      %2088 = vperm.xlu0 %2087, %v2074
      %v2089 = vpop.permute.xlu0 %2088
      %2092 = vset.pattern.permute.xlu0 0
      %2093 = vperm.xlu0 %2092, %v2075
      %v2094 = vpop.permute.xlu0 %2093
      %v2097 = vsel %vm890, %v2068, 0
      %v2100 = vsel %vm890, %v2069, 0
      %v2103 = vsel %vm890, %v2070, 0
      %v2106 = vsel %vm890, %v2071, 0
      %2108 = vmatprep.subr.mxu0 0.0
      %2109 = vmatpush1.msra.mxu0 0.0
      %2110 = vmatprep.subr.mxu0 0.0
      %2111 = vmatpush1.msra.mxu0 0.0
      %2112 = vmatprep.subr.mxu0 0.0
      %2113 = vmatpush1.msra.mxu0 0.0
      %2114 = vmatprep.subr.mxu0 0.0
      %2115 = vmatpush1.msra.mxu0 0.0
      %2116 = vmatprep.subr.mxu0 0.0
      %2117 = vmatpush1.msra.mxu0 0.0
      %2118 = vmatprep.subr.mxu0 0.0
      %2119 = vmatpush1.msra.mxu0 0.0
      %2120 = vmatprep.subr.mxu0 0.0
      %2121 = vmatpush1.msra.mxu0 0.0
      %2122 = vmatprep.subr.mxu0 0.0
      %2123 = vmatpush1.msra.mxu0 0.0
      %2124 = vmatprep.subr.mxu0 0.0
      %2125 = vmatpush1.msra.mxu0 0.0
      %2126 = vmatprep.subr.mxu0 0.0
      %2127 = vmatpush1.msra.mxu0 0.0
      %2128 = vmatprep.subr.mxu0 0.0
      %2129 = vmatpush1.msra.mxu0 0.0
      %2130 = vmatprep.subr.mxu0 0.0
      %2131 = vmatpush1.msra.mxu0 0.0
      %2132 = vmatprep.subr.mxu0 %v2067
      %2133 = vmatpush1.msra.mxu0 %v2066
      %2134 = vmatprep.subr.mxu0 %v2065
      %2135 = vmatpush1.msra.mxu0 %v2064
      %2136 = vmatprep.subr.mxu0 %v2063
      %2137 = vmatpush1.msra.mxu0 %v2062
      %2138 = vmatprep.subr.mxu0 %v2061
      %2139 = vmatpush1.msra.mxu0 %v2060
      %2140 = vmatprep.subr.mxu0 0.0
      %2141 = vmatpush2.msra.mxu0 0.0
      %2142 = vmatprep.subr.mxu0 0.0
      %2143 = vmatpush2.msra.mxu0 0.0
      %2144 = vmatprep.subr.mxu0 0.0
      %2145 = vmatpush2.msra.mxu0 0.0
      %2146 = vmatprep.subr.mxu0 0.0
      %2147 = vmatpush2.msra.mxu0 0.0
      %2148 = vmatprep.subr.mxu0 0.0
      %2149 = vmatpush2.msra.mxu0 0.0
      %2150 = vmatprep.subr.mxu0 0.0
      %2151 = vmatpush2.msra.mxu0 0.0
      %2152 = vmatprep.subr.mxu0 0.0
      %2153 = vmatpush2.msra.mxu0 0.0
      %2154 = vmatprep.subr.mxu0 0.0
      %2155 = vmatpush2.msra.mxu0 0.0
      %2156 = vmatprep.subr.mxu0 0.0
      %2157 = vmatpush2.msra.mxu0 0.0
      %2158 = vmatprep.subr.mxu0 0.0
      %2159 = vmatpush2.msra.mxu0 0.0
      %2160 = vmatprep.subr.mxu0 0.0
      %2161 = vmatpush2.msra.mxu0 0.0
      %2162 = vmatprep.subr.mxu0 0.0
      %2163 = vmatpush2.msra.mxu0 0.0
      %2164 = vmatprep.subr.mxu0 0.0
      %2165 = vmatpush2.msra.mxu0 0.0
      %2166 = vmatprep.subr.mxu0 0.0
      %2167 = vmatpush2.msra.mxu0 0.0
      %2168 = vmatprep.subr.mxu0 0.0
      %2169 = vmatpush2.msra.mxu0 0.0
      %2170 = vmatprep.subr.mxu0 0.0
      %2171 = vmatpush2.msra.mxu0 0.0
      %2172 = vmatprep.mubr.f32.mxu0 0.0
      %2173 = vmatmul.mubr.f32.gmra.mxu0 %v2097
      %v2174 = vpop.f32.mrf.mxu0
      %v2175 = vadd.f32 %v2079, %v2174
      %v2176 = vpop.f32.mrf.mxu0
      %v2177 = vadd.f32 %v2079, %v2176
      %2178 = vmatprep.mubr.f32.mxu0 0.0
      %2179 = vmatmul.mubr.f32.gmra.mxu0 %v2100
      %v2180 = vpop.f32.mrf.mxu0
      %v2181 = vadd.f32 %v2084, %v2180
      %v2182 = vpop.f32.mrf.mxu0
      %v2183 = vadd.f32 %v2084, %v2182
      %2184 = vmatprep.mubr.f32.mxu0 0.0
      %2185 = vmatmul.mubr.f32.gmra.mxu0 %v2103
      %v2186 = vpop.f32.mrf.mxu0
      %v2187 = vadd.f32 %v2089, %v2186
      %v2188 = vpop.f32.mrf.mxu0
      %v2189 = vadd.f32 %v2089, %v2188
      %2190 = vmatprep.mubr.f32.mxu0 0.0
      %2191 = vmatmul.mubr.f32.gmra.mxu0 %v2106
      %v2192 = vpop.f32.mrf.mxu0
      %v2193 = vadd.f32 %v2094, %v2192
      %v2194 = vpop.f32.mrf.mxu0
      %v2195 = vadd.f32 %v2094, %v2194
      %2196 = vdwg.mxu0
      %vm2197 = vcmp.gt.f32.partialorder %v2175, 20.0
      %vm2198 = vcmp.gt.f32.partialorder %v2177, 20.0
      %vm2199 = vcmp.gt.f32.partialorder %v2181, 20.0
      %vm2200 = vcmp.gt.f32.partialorder %v2183, 20.0
      %vm2201 = vcmp.gt.f32.partialorder %v2187, 20.0
      %vm2202 = vcmp.gt.f32.partialorder %v2189, 20.0
      %vm2203 = vcmp.gt.f32.partialorder %v2193, 20.0
      %vm2204 = vcmp.gt.f32.partialorder %v2195, 20.0
      %v2205 = vmin.f32 %v2175, 20.0
      %v2206 = vmin.f32 %v2177, 20.0
      %v2207 = vmin.f32 %v2181, 20.0
      %v2208 = vmin.f32 %v2183, 20.0
      %v2209 = vmin.f32 %v2187, 20.0
      %v2210 = vmin.f32 %v2189, 20.0
      %v2211 = vmin.f32 %v2193, 20.0
      %v2212 = vmin.f32 %v2195, 20.0
      %v2213 = vmul.f32 %v2205, 1.442695
      %v2214 = vpow.pop %v2213
      %v2215 = vmul.f32 %v2206, 1.442695
      %v2216 = vpow.pop %v2215
      %v2217 = vmul.f32 %v2207, 1.442695
      %v2218 = vpow.pop %v2217
      %v2219 = vmul.f32 %v2208, 1.442695
      %v2220 = vpow.pop %v2219
      %v2221 = vmul.f32 %v2209, 1.442695
      %v2222 = vpow.pop %v2221
      %v2223 = vmul.f32 %v2210, 1.442695
      %v2224 = vpow.pop %v2223
      %v2225 = vmul.f32 %v2211, 1.442695
      %v2226 = vpow.pop %v2225
      %v2227 = vmul.f32 %v2212, 1.442695
      %v2228 = vpow.pop %v2227
      %v2229 = vadd.f32 %v2214, 1.0
      %v2230 = vlog2.pop %v2229
      %v2231 = vmul.f32 %v2230, 0.6931472
      %v2232 = vmul.f32 -0.5, %v2214
      %v2233 = vadd.f32 %v2232, 1.0
      %v2234 = vmul.f32 %v2233, %v2214
      %v2235 = vand.u32 2147483647, %v2214
      %vm2236 = vcmp.lt.f32.partialorder %v2235, 0.0004427343
      %v2237 = vsel %vm2236, %v2234, %v2231
      %v2238 = vadd.f32 %v2216, 1.0
      %v2239 = vlog2.pop %v2238
      %v2240 = vmul.f32 %v2239, 0.6931472
      %v2241 = vmul.f32 -0.5, %v2216
      %v2242 = vadd.f32 %v2241, 1.0
      %v2243 = vmul.f32 %v2242, %v2216
      %v2244 = vand.u32 2147483647, %v2216
      %vm2245 = vcmp.lt.f32.partialorder %v2244, 0.0004427343
      %v2246 = vsel %vm2245, %v2243, %v2240
      %v2247 = vadd.f32 %v2218, 1.0
      %v2248 = vlog2.pop %v2247
      %v2249 = vmul.f32 %v2248, 0.6931472
      %v2250 = vmul.f32 -0.5, %v2218
      %v2251 = vadd.f32 %v2250, 1.0
      %v2252 = vmul.f32 %v2251, %v2218
      %v2253 = vand.u32 2147483647, %v2218
      %vm2254 = vcmp.lt.f32.partialorder %v2253, 0.0004427343
      %v2255 = vsel %vm2254, %v2252, %v2249
      %v2256 = vadd.f32 %v2220, 1.0
      %v2257 = vlog2.pop %v2256
      %v2258 = vmul.f32 %v2257, 0.6931472
      %v2259 = vmul.f32 -0.5, %v2220
      %v2260 = vadd.f32 %v2259, 1.0
      %v2261 = vmul.f32 %v2260, %v2220
      %v2262 = vand.u32 2147483647, %v2220
      %vm2263 = vcmp.lt.f32.partialorder %v2262, 0.0004427343
      %v2264 = vsel %vm2263, %v2261, %v2258
      %v2265 = vadd.f32 %v2222, 1.0
      %v2266 = vlog2.pop %v2265
      %v2267 = vmul.f32 %v2266, 0.6931472
      %v2268 = vmul.f32 -0.5, %v2222
      %v2269 = vadd.f32 %v2268, 1.0
      %v2270 = vmul.f32 %v2269, %v2222
      %v2271 = vand.u32 2147483647, %v2222
      %vm2272 = vcmp.lt.f32.partialorder %v2271, 0.0004427343
      %v2273 = vsel %vm2272, %v2270, %v2267
      %v2274 = vadd.f32 %v2224, 1.0
      %v2275 = vlog2.pop %v2274
      %v2276 = vmul.f32 %v2275, 0.6931472
      %v2277 = vmul.f32 -0.5, %v2224
      %v2278 = vadd.f32 %v2277, 1.0
      %v2279 = vmul.f32 %v2278, %v2224
      %v2280 = vand.u32 2147483647, %v2224
      %vm2281 = vcmp.lt.f32.partialorder %v2280, 0.0004427343
      %v2282 = vsel %vm2281, %v2279, %v2276
      %v2283 = vadd.f32 %v2226, 1.0
      %v2284 = vlog2.pop %v2283
      %v2285 = vmul.f32 %v2284, 0.6931472
      %v2286 = vmul.f32 -0.5, %v2226
      %v2287 = vadd.f32 %v2286, 1.0
      %v2288 = vmul.f32 %v2287, %v2226
      %v2289 = vand.u32 2147483647, %v2226
      %vm2290 = vcmp.lt.f32.partialorder %v2289, 0.0004427343
      %v2291 = vsel %vm2290, %v2288, %v2285
      %v2292 = vadd.f32 %v2228, 1.0
      %v2293 = vlog2.pop %v2292
      %v2294 = vmul.f32 %v2293, 0.6931472
      %v2295 = vmul.f32 -0.5, %v2228
      %v2296 = vadd.f32 %v2295, 1.0
      %v2297 = vmul.f32 %v2296, %v2228
      %v2298 = vand.u32 2147483647, %v2228
      %vm2299 = vcmp.lt.f32.partialorder %v2298, 0.0004427343
      %v2300 = vsel %vm2299, %v2297, %v2294
      %v2301 = vsel %vm2197, %v2175, %v2237
      %v2302 = vsel %vm2198, %v2177, %v2246
      %v2303 = vsel %vm2199, %v2181, %v2255
      %v2304 = vsel %vm2200, %v2183, %v2264
      %v2305 = vsel %vm2201, %v2187, %v2273
      %v2306 = vsel %vm2202, %v2189, %v2282
      %v2307 = vsel %vm2203, %v2193, %v2291
      %v2308 = vsel %vm2204, %v2195, %v2300
      %v2309 = vld [vmem:[%s17] sm:$0xff]
      %v2310 = vld [vmem:[%s17 + $0x8] sm:$0xff]
      %v2311 = vld [vmem:[%s17 + $0x10] sm:$0xff]
      %v2312 = vld [vmem:[%s17 + $0x18] sm:$0xff]
      %2314 = vset.pattern.permute.xlu0 0
      %2315 = vperm.xlu0 %2314, %v2309
      %v2316 = vpop.permute.xlu0 %2315
      %2319 = vset.pattern.permute.xlu0 0
      %2320 = vperm.xlu0 %2319, %v2310
      %v2321 = vpop.permute.xlu0 %2320
      %2324 = vset.pattern.permute.xlu0 0
      %2325 = vperm.xlu0 %2324, %v2311
      %v2326 = vpop.permute.xlu0 %2325
      %2329 = vset.pattern.permute.xlu0 0
      %2330 = vperm.xlu0 %2329, %v2312
      %v2331 = vpop.permute.xlu0 %2330
      %v2333 = vmul.f32 %v2301, %v2316
      %v2334 = vmul.f32 %v2302, %v2316
      %v2335 = vmul.f32 %v2303, %v2321
      %v2336 = vmul.f32 %v2304, %v2321
      %v2337 = vmul.f32 %v2305, %v2326
      %v2338 = vmul.f32 %v2306, %v2326
      %v2339 = vmul.f32 %v2307, %v2331
      %v2340 = vmul.f32 %v2308, %v2331
      %v2341 = vadd.f32 %v2333, %v2335
      %v2342 = vadd.f32 %v2341, %v2337
      %v2343 = vadd.f32 %v2342, %v2339
      %v2344 = vrot.slane %v2343, 4
      %v2345 = vadd.f32 %v2343, %v2344
      %v2346 = vrot.slane %v2345, 2
      %v2347 = vadd.f32 %v2345, %v2346
      %v2348 = vrot.slane %v2347, 1
      %v2349 = vadd.f32 %v2347, %v2348
      %v2350 = vadd.f32 %v2334, %v2336
      %v2351 = vadd.f32 %v2350, %v2338
      %v2352 = vadd.f32 %v2351, %v2340
      %v2353 = vrot.slane %v2352, 4
      %v2354 = vadd.f32 %v2352, %v2353
      %v2355 = vrot.slane %v2354, 2
      %v2356 = vadd.f32 %v2354, %v2355
      %v2357 = vrot.slane %v2356, 1
      %v2358 = vadd.f32 %v2356, %v2357
      %v2359 = vld [vmem:[#allocation2] sm:$0x1]
      %2361 = vset.pattern.permute.xlu0 0
      %2362 = vperm.xlu0 %2361, %v2359
      %v2363 = vpop.permute.xlu0 %2362
      %v2365 = vlaneseq
      %v2366 = vshrl.u32 %v2365, 7
      %v2367 = vsub.s32 0, %v2366
      %v2368 = vrot.slane %v2363, %v2367
      %v2369 = vadd.f32 %v2349, %v2368
      %v2370 = vadd.f32 %v2358, %v2368
      %vm2371 = vcmp.gt.f32.partialorder %v2369, 20.0
      %vm2372 = vcmp.gt.f32.partialorder %v2370, 20.0
      %v2373 = vmin.f32 %v2369, 20.0
      %v2374 = vmin.f32 %v2370, 20.0
      %v2375 = vmul.f32 %v2373, 1.442695
      %v2376 = vpow.pop %v2375
      %v2377 = vmul.f32 %v2374, 1.442695
      %v2378 = vpow.pop %v2377
      %v2379 = vadd.f32 %v2376, 1.0
      %v2380 = vlog2.pop %v2379
      %v2381 = vmul.f32 %v2380, 0.6931472
      %v2382 = vmul.f32 -0.5, %v2376
      %v2383 = vadd.f32 %v2382, 1.0
      %v2384 = vmul.f32 %v2383, %v2376
      %v2385 = vand.u32 2147483647, %v2376
      %vm2386 = vcmp.lt.f32.partialorder %v2385, 0.0004427343
      %v2387 = vsel %vm2386, %v2384, %v2381
      %v2388 = vadd.f32 %v2378, 1.0
      %v2389 = vlog2.pop %v2388
      %v2390 = vmul.f32 %v2389, 0.6931472
      %v2391 = vmul.f32 -0.5, %v2378
      %v2392 = vadd.f32 %v2391, 1.0
      %v2393 = vmul.f32 %v2392, %v2378
      %v2394 = vand.u32 2147483647, %v2378
      %vm2395 = vcmp.lt.f32.partialorder %v2394, 0.0004427343
      %v2396 = vsel %vm2395, %v2393, %v2390
      %v2397 = vsel %vm2371, %v2369, %v2387
      %v2398 = vsel %vm2372, %v2370, %v2396
      %v2401 = vcombine.low %v2397, %v2398
      %v2403 = vunpack.c.l.s4 1966171168
      %v2404 = vunpack.c.0.s8 %v2403
      %v2405 = vlaneseq
      %v2406 = vshrl.u32 %v2405, 7
      %v2407 = vsub.s32 %v2404, %v2406
      %v2408 = vrot.slane %v2401, %v2407
      %v2410 = vunpack.c.l.s4 1966171168
      %v2411 = vunpack.c.0.s8 %v2410
      %v2412 = vlaneseq
      %v2413 = vshrl.u32 %v2412, 7
      %v2414 = vsub.s32 %v2411, %v2413
      %v2415 = vrot.slane %v2408, %v2414
      %v2417 = vlaneseq
      %vm2418 = vcmp.ge.s32.totalorder %v2417, 0
      %vm2419 = vcmp.lt.s32.totalorder %v2417, 256
      %vm2420 = vmand %vm2418, %vm2419
      %2421 = vst.msk [vmem:[%s620] sm:$0x3] %vm2420, %v2415
      %s2422 = smul.u32 2, %s32
      %p2423 = scmp.lt.s32.totalorder %s2422, 7
      %s2424 = scalar_select %p2423, %s2422, 7
      %s2425 = scalar_lea.vmem %s19, %s2424
      // Predicated region
      $region97: #{net_forward.1} parent=95 // pred_check
        %p2426 = pneg %p459
      $region98: #{net_forward.1} parent=95 // pred_check_branch
        %2428 = sbr.rel (%p2426) target = $region100
      $region99: #{net_forward.1} parent=95 // pred_region
        %s2429 = smul.u32 2, %s32
      $region100: #{net_forward.1} parent=95 // pred_fallthru
        _
    $region96: #{net_forward.1} parent=5 // pred_fallthru
      _
    %p2430 = scmp.le.s32.totalorder 2, %s27
    // Predicated region
    $region101: #{net_forward.1} parent=5 // pred_check
      %p2431 = pneg %p2430
    $region102: #{net_forward.1} parent=5 // pred_check_branch
      %2433 = sbr.rel (%p2431) target = $region104
    $region103: #{net_forward.1} parent=5 // pred_region
      %s2434 = ssub.s32 %s27, 2
      // Predicated region
      $region105: #{net_forward.1} parent=103 // pred_check
        %p2435 = pneg %p465
      $region106: #{net_forward.1} parent=103 // pred_check_branch
        %2437 = sbr.rel (%p2435) target = $region108
      $region107: #{net_forward.1} parent=103 // pred_region
        %s2438 = smul.u32 2, %s33
        %p2439 = scmp.lt.s32.totalorder %s2438, 7
        %s2440 = scalar_select %p2439, %s2438, 7
        %s2441 = scalar_lea.vmem %s19, %s2440
      $region108: #{net_forward.1} parent=103 // pred_fallthru
        _
    $region104: #{net_forward.1} parent=5 // pred_fallthru
      _
  $region6: #{net_forward.1} parent=0 // loop_footer
    %s31 = sadd.s32 1, %s27
  $region7: #{net_forward.1} parent=0 // loop_footer_branch
    %26 = sbr.rel target = $region3
  $region8: #{net_forward.1} parent=0 // loop_exit
    _

</llo_original>
